<compile_context>
chip_gen: v7x
topology: tpu7x:2x2x1
jax: 0.10.0
libtpu: 0.0.40
codegen_flags: <defaults>
</compile_context>

<pallas_src>
import functools

import jax
import jax.numpy as jnp
from jax.experimental import pallas as pl
from jax.experimental.pallas import tpu as pltpu

HIGHEST = jax.lax.Precision.HIGHEST  # used only by the pure-JAX reference


# ----------------------------------------------------------------------------
# Fused Pallas kernel: the whole residual group for one batch image.
# ----------------------------------------------------------------------------
def _residual_group_kernel(x_ref, w1_ref, b1_ref, w2_ref, b2_ref,
                           cw1_ref, cb1_ref, cw2t_ref, cb2_ref,
                           wf_ref, bf_ref, o_ref, r_ref,
                           *, n_blocks, height, width):
    C = x_ref.shape[1]
    H, W = height, width
    P = H * W
    inv_hw = 1.0 / P

    # Horizontal-wrap masks for the flattened-pixel taps (vertical out-of-range
    # taps land in the zero lane padding instead).  Computed once per image.
    pj = jax.lax.broadcasted_iota(jnp.int32, (1, P), 1) % W
    mask_l = pj != 0          # rows invalid for dx = -1 taps (j == 0)
    mask_r = pj != (W - 1)    # rows invalid for dx = +1 taps (j == W-1)
    zpad = jnp.zeros((C, W + 1), jnp.bfloat16)

    def conv3x3(a_f32, w3, bias):
        """3x3 'same' conv in (C, H*W) layout.

        a_f32: (C, P) f32 input; w3: (3, C, 3C) bf16 with w3[ky][co, kx*C+ci];
        bias: (C, 1) f32.  The input is cast to bf16 once, lane-padded with
        W+1 zero pixels on each side, and each tap is a static lane-offset
        slice; one MXU matmul per ky (K = 3C) with f32 accumulation.
        """
        a_bf = a_f32.astype(jnp.bfloat16)                        # cast once
        a_pad = jnp.concatenate([zpad, a_bf, zpad], axis=1)      # (C, P + 2W + 2)
        acc = jnp.zeros((C, P), jnp.float32)
        for ky in range(3):
            dy = ky - 1
            taps = []
            for kx in range(3):
                dx = kx - 1
                start = (W + 1) + dy * W + dx                    # static, >= 0
                t = a_pad[:, start:start + P]                    # lane shift
                if dx == -1:
                    t = jnp.where(mask_l, t, 0)
                elif dx == 1:
                    t = jnp.where(mask_r, t, 0)
                taps.append(t)
            patch = jnp.concatenate(taps, axis=0)                # (3C, P), sublane stack
            acc = acc + jnp.dot(w3[ky], patch,
                                preferred_element_type=jnp.float32)
        return acc + bias                                        # f32 epilogue

    # Residual stream lives in an aligned, unpadded f32 VMEM scratch.
    r_ref[...] = x_ref[0]                                        # (C, P)

    def rcab(b, carry):
        # conv1 + ReLU
        h1 = jnp.maximum(conv3x3(r_ref[...], w1_ref[b], b1_ref[b]), 0.0)
        # conv2
        h2 = conv3x3(h1, w2_ref[b], b2_ref[b])                   # (C, P) f32
        # Channel attention -- VPU only (broadcast-multiply + reduce), no MXU.
        gap = jnp.sum(h2, axis=1, keepdims=True) * inv_hw        # (C, 1)
        t1 = jnp.maximum(
            jnp.sum(gap * cw1_ref[b], axis=0, keepdims=True) + cb1_ref[b],
            0.0)                                                 # (1, Cr)
        scale = jax.nn.sigmoid(
            jnp.sum(t1 * cw2t_ref[b], axis=1, keepdims=True) + cb2_ref[b])  # (C, 1)
        # RCAB residual.
        r_ref[...] = h2 * scale + r_ref[...]
        return carry

    jax.lax.fori_loop(0, n_blocks, rcab, 0)

    # Final group conv + group skip.
    o_ref[0] = conv3x3(r_ref[...], wf_ref[...], bf_ref[...]) + x_ref[0]


# ----------------------------------------------------------------------------
# Wrapper: pack/stack weights once, one pallas_call for the whole group.
# ----------------------------------------------------------------------------
def residual_group_pallas(x, params):
    """x: (N, C, H, W) float32, NCHW (same layout as the PyTorch module)."""
    N, C, H, W = x.shape
    P = H * W
    blocks = params["blocks"]
    nb = len(blocks)
    Cr = blocks[0]["cw1"].shape[1]

    def pack_conv_w(w_oihw):
        # (Cout, Cin, 3, 3) -> (3, Cout, 3*Cin) bf16 with [ky, co, kx*Cin + ci].
        return jnp.transpose(w_oihw, (2, 0, 3, 1)).reshape(3, C, 3 * C) \
                  .astype(jnp.bfloat16)

    w1s = jnp.stack([pack_conv_w(blk["w1"]) for blk in blocks])      # (nb,3,C,3C) bf16
    w2s = jnp.stack([pack_conv_w(blk["w2"]) for blk in blocks])
    b1s = jnp.stack([blk["b1"].reshape(C, 1) for blk in blocks])     # (nb,C,1) f32
    b2s = jnp.stack([blk["b2"].reshape(C, 1) for blk in blocks])
    cw1s = jnp.stack([blk["cw1"] for blk in blocks])                 # (nb,C,Cr) f32
    cb1s = jnp.stack([blk["cb1"].reshape(1, Cr) for blk in blocks])  # (nb,1,Cr)
    cw2ts = jnp.stack([blk["cw2"].T for blk in blocks])              # (nb,C,Cr) (transposed)
    cb2s = jnp.stack([blk["cb2"].reshape(C, 1) for blk in blocks])   # (nb,C,1)
    wf = pack_conv_w(params["wf"])                                   # (3,C,3C) bf16
    bf = params["bf"].reshape(C, 1)

    x_flat = x.reshape(N, C, P)   # free reshape: (C, H*W) is lane-dense

    def whole(shape):
        # Whole-array block with a constant index map: weights/biases stay
        # resident in VMEM across the grid.  (A single-buffered pipeline_mode
        # would save a trivial amount of VMEM here; left at the default.)
        return pl.BlockSpec(shape, lambda n: (0,) * len(shape))

    kernel = functools.partial(_residual_group_kernel,
                               n_blocks=nb, height=H, width=W)

    out = pl.pallas_call(
        kernel,
        out_shape=jax.ShapeDtypeStruct((N, C, P), jnp.float32),
        grid=(N,),
        in_specs=[
            pl.BlockSpec((1, C, P), lambda n: (n, 0, 0)),   # x (lane-dense)
            whole((nb, 3, C, 3 * C)),                       # conv1 weights (packed)
            whole((nb, C, 1)),                              # conv1 bias
            whole((nb, 3, C, 3 * C)),                       # conv2 weights (packed)
            whole((nb, C, 1)),                              # conv2 bias
            whole((nb, C, Cr)),                             # CA w1
            whole((nb, 1, Cr)),                             # CA b1
            whole((nb, C, Cr)),                             # CA w2 (transposed)
            whole((nb, C, 1)),                              # CA b2
            whole((3, C, 3 * C)),                           # final conv weights
            whole((C, 1)),                                  # final conv bias
        ],
        out_specs=pl.BlockSpec((1, C, P), lambda n: (n, 0, 0)),
        scratch_shapes=[
            pltpu.VMEM((C, P), jnp.float32),                # residual stream r
        ],
        compiler_params=pltpu.CompilerParams(
            dimension_semantics=("parallel",),              # batch across TCs
            # Plenty for this working set; raise toward ~100 MiB on the
            # 128-MiB parts (v5e/v6e) for large images before row-tiling.
            vmem_limit_bytes=32 * 1024 * 1024,
        ),
    )(x_flat, w1s, b1s, w2s, b2s, cw1s, cb1s, cw2ts, cb2s, wf, bf)

    return out.reshape(N, C, H, W)


# ----------------------------------------------------------------------------
# Model: parameters + pure-JAX reference (ground truth, f32 HIGHEST, NCHW).
# ----------------------------------------------------------------------------
def init_params(key, n_feat, reduction, n_resblocks):
    cr = n_feat // reduction
    params = {"blocks": []}
    for _ in range(n_resblocks):
        keys = jax.random.split(key, 9)
        key = keys[0]
        blk = {
            "w1": 0.05 * jax.random.normal(keys[1], (n_feat, n_feat, 3, 3), jnp.float32),
            "b1": 0.05 * jax.random.normal(keys[2], (n_feat,), jnp.float32),
            "w2": 0.05 * jax.random.normal(keys[3], (n_feat, n_feat, 3, 3), jnp.float32),
            "b2": 0.05 * jax.random.normal(keys[4], (n_feat,), jnp.float32),
            "cw1": 0.05 * jax.random.normal(keys[5], (n_feat, cr), jnp.float32),
            "cb1": 0.05 * jax.random.normal(keys[6], (cr,), jnp.float32),
            "cw2": 0.05 * jax.random.normal(keys[7], (cr, n_feat), jnp.float32),
            "cb2": 0.05 * jax.random.normal(keys[8], (n_feat,), jnp.float32),
        }
        params["blocks"].append(blk)
    kf1, kf2 = jax.random.split(key)
    params["wf"] = 0.05 * jax.random.normal(kf1, (n_feat, n_feat, 3, 3), jnp.float32)
    params["bf"] = 0.05 * jax.random.normal(kf2, (n_feat,), jnp.float32)
    return params


def residual_group_ref(x, params):
    def conv(z, w, b):
        y = jax.lax.conv_general_dilated(
            z, w, (1, 1), "SAME",
            dimension_numbers=("NCHW", "OIHW", "NCHW"), precision=HIGHEST)
        return y + b.reshape(1, -1, 1, 1)

    r = x
    for blk in params["blocks"]:
        h = jax.nn.relu(conv(r, blk["w1"], blk["b1"]))
        h = conv(h, blk["w2"], blk["b2"])
        gap = jnp.mean(h, axis=(2, 3))                                    # (N, C)
        t = jax.nn.relu(jnp.einsum("nc,cr->nr", gap, blk["cw1"],
                                   precision=HIGHEST) + blk["cb1"])
        s = jax.nn.sigmoid(jnp.einsum("nr,rc->nc", t, blk["cw2"],
                                      precision=HIGHEST) + blk["cb2"])
        r = h * s[:, :, None, None] + r
    return conv(r, params["wf"], params["bf"]) + x


if __name__ == "__main__":
    N, H, W = 2, 16, 16
    n_feat, reduction, n_resblocks = 32, 8, 2

    key = jax.random.PRNGKey(0)
    kx, kp = jax.random.split(key)
    x = jax.random.normal(kx, (N, n_feat, H, W), jnp.float32)   # NCHW, like PyTorch
    params = init_params(kp, n_feat, reduction, n_resblocks)

    out = jax.block_until_ready(residual_group_pallas(x, params))
    ref = jax.block_until_ready(residual_group_ref(x, params))

    assert out.shape == (N, n_feat, H, W)
    max_err = float(jnp.max(jnp.abs(out - ref)))
    # bf16 MXU matmuls (f32 accumulation) vs the f32-HIGHEST reference.
    assert max_err < 5e-2, f"mismatch vs reference: {max_err}"
    print("KERNEL_OK")
</pallas_src>

<mosaic_0001>
module attributes {stable_mosaic.version = 11 : i64} {
  func.func @_residual_group_kernel(%arg0: i32, %arg1: memref<1x32x256xf32, #tpu.memory_space<vmem>>, %arg2: memref<2x3x32x96xbf16, #tpu.memory_space<vmem>>, %arg3: memref<2x32x1xf32, #tpu.memory_space<vmem>>, %arg4: memref<2x3x32x96xbf16, #tpu.memory_space<vmem>>, %arg5: memref<2x32x1xf32, #tpu.memory_space<vmem>>, %arg6: memref<2x32x4xf32, #tpu.memory_space<vmem>>, %arg7: memref<2x1x4xf32, #tpu.memory_space<vmem>>, %arg8: memref<2x32x4xf32, #tpu.memory_space<vmem>>, %arg9: memref<2x32x1xf32, #tpu.memory_space<vmem>>, %arg10: memref<3x32x96xbf16, #tpu.memory_space<vmem>>, %arg11: memref<32x1xf32, #tpu.memory_space<vmem>>, %arg12: memref<1x32x256xf32, #tpu.memory_space<vmem>>, %arg13: memref<32x256xf32, #tpu.memory_space<vmem>>) attributes {dimension_semantics = [#tpu.dimension_semantics<parallel>], iteration_bounds = array<i64: 2>, scalar_prefetch = 0 : i64, scratch_operands = 1 : i64, tpu.core_type = #tpu.core_type<tc>, window_params = [{transform_indices = @transform_0, window_bounds = array<i64: 1, 32, 256>}, {pipeline_mode = #tpu.pipeline_mode<synchronous>, transform_indices = @transform_1, window_bounds = array<i64: 2, 3, 32, 96>}, {pipeline_mode = #tpu.pipeline_mode<synchronous>, transform_indices = @transform_2, window_bounds = array<i64: 2, 32, 1>}, {pipeline_mode = #tpu.pipeline_mode<synchronous>, transform_indices = @transform_3, window_bounds = array<i64: 2, 3, 32, 96>}, {pipeline_mode = #tpu.pipeline_mode<synchronous>, transform_indices = @transform_4, window_bounds = array<i64: 2, 32, 1>}, {pipeline_mode = #tpu.pipeline_mode<synchronous>, transform_indices = @transform_5, window_bounds = array<i64: 2, 32, 4>}, {pipeline_mode = #tpu.pipeline_mode<synchronous>, transform_indices = @transform_6, window_bounds = array<i64: 2, 1, 4>}, {pipeline_mode = #tpu.pipeline_mode<synchronous>, transform_indices = @transform_7, window_bounds = array<i64: 2, 32, 4>}, {pipeline_mode = #tpu.pipeline_mode<synchronous>, transform_indices = @transform_8, window_bounds = array<i64: 2, 32, 1>}, {pipeline_mode = #tpu.pipeline_mode<synchronous>, transform_indices = @transform_9, window_bounds = array<i64: 3, 32, 96>}, {pipeline_mode = #tpu.pipeline_mode<synchronous>, transform_indices = @transform_10, window_bounds = array<i64: 32, 1>}, {transform_indices = @transform_11, window_bounds = array<i64: 1, 32, 256>}]} {
    %0 = tpu.iota {dimensions = array<i32: 1>} : vector<1x256xi32>
    %c16_i32 = arith.constant 16 : i32
    %c0_i32 = arith.constant 0 : i32
    %1 = arith.cmpi eq, %c16_i32, %c0_i32 : i32
    %c1_i32 = arith.constant 1 : i32
    %2 = arith.select %1, %c1_i32, %c16_i32 : i32
    %3 = vector.broadcast %2 : i32 to vector<1x256xi32>
    %4 = arith.remsi %0, %3 : vector<1x256xi32>
    %c0_i32_0 = arith.constant 0 : i32
    %5 = vector.broadcast %c0_i32_0 : i32 to vector<1x256xi32>
    %6 = arith.cmpi ne, %4, %5 : vector<1x256xi32>
    %c0_i32_1 = arith.constant 0 : i32
    %7 = vector.broadcast %c0_i32_1 : i32 to vector<1x256xi32>
    %8 = arith.cmpi slt, %4, %7 : vector<1x256xi32>
    %c0_i32_2 = arith.constant 0 : i32
    %9 = arith.cmpi slt, %2, %c0_i32_2 : i32
    %10 = vector.broadcast %9 : i1 to vector<1x256xi1>
    %11 = vector.broadcast %10 : vector<1x256xi1> to vector<1x256xi1>
    %12 = arith.xori %8, %11 : vector<1x256xi1>
    %13 = arith.andi %12, %6 : vector<1x256xi1>
    %14 = vector.broadcast %2 : i32 to vector<1x256xi32>
    %15 = arith.addi %4, %14 : vector<1x256xi32>
    %16 = arith.select %13, %15, %4 : vector<1x256xi1>, vector<1x256xi32>
    %c0_i32_3 = arith.constant 0 : i32
    %17 = vector.broadcast %c0_i32_3 : i32 to vector<1x256xi32>
    %18 = arith.cmpi ne, %16, %17 : vector<1x256xi32>
    %c15_i32 = arith.constant 15 : i32
    %19 = vector.broadcast %c15_i32 : i32 to vector<1x256xi32>
    %20 = arith.cmpi ne, %16, %19 : vector<1x256xi32>
    %cst = arith.constant 0.000000e+00 : bf16
    %21 = vector.broadcast %cst : bf16 to vector<32x17xbf16>
    %c0 = arith.constant 0 : index
    %c0_4 = arith.constant 0 : index
    %c0_5 = arith.constant 0 : index
    %22 = vector.load %arg1[%c0, %c0_4, %c0_5] : memref<1x32x256xf32, #tpu.memory_space<vmem>>, vector<1x32x256xf32>
    %23 = vector.shape_cast %22 : vector<1x32x256xf32> to vector<32x256xf32>
    %c0_6 = arith.constant 0 : index
    %c0_7 = arith.constant 0 : index
    %24 = vector.load %arg13[%c0_6, %c0_7] : memref<32x256xf32, #tpu.memory_space<vmem>>, vector<32x256xf32>
    tpu.vector_store %arg13[%c0_6, %c0_7], %23 {strides = array<i32>} : memref<32x256xf32, #tpu.memory_space<vmem>>, vector<32x256xf32>,
    %c0_i32_8 = arith.constant 0 : i32
    %c2_i32 = arith.constant 2 : i32
    %25 = arith.addi %c0_i32_8, %c2_i32 : i32
    %c1_i32_9 = arith.constant 1 : i32
    scf.for %arg14 = %c0_i32_8 to %25 step %c1_i32_9  : i32 {
      %c0_34 = arith.constant 0 : index
      %c0_35 = arith.constant 0 : index
      %94 = vector.load %arg13[%c0_34, %c0_35] : memref<32x256xf32, #tpu.memory_space<vmem>>, vector<32x256xf32>
      %95 = arith.index_cast %arg14 : i32 to index
      %c0_36 = arith.constant 0 : index
      %c0_37 = arith.constant 0 : index
      %c0_38 = arith.constant 0 : index
      %96 = vector.load %arg2[%95, %c0_36, %c0_37, %c0_38] : memref<2x3x32x96xbf16, #tpu.memory_space<vmem>>, vector<1x3x32x96xbf16>
      %97 = vector.shape_cast %96 : vector<1x3x32x96xbf16> to vector<3x32x96xbf16>
      %98 = arith.index_cast %arg14 : i32 to index
      %c0_39 = arith.constant 0 : index
      %c0_40 = arith.constant 0 : index
      %99 = vector.load %arg3[%98, %c0_39, %c0_40] : memref<2x32x1xf32, #tpu.memory_space<vmem>>, vector<1x32x1xf32>
      %100 = vector.shape_cast %99 : vector<1x32x1xf32> to vector<32x1xf32>
      %101 = arith.truncf %94 : vector<32x256xf32> to vector<32x256xbf16>
      %102 = tpu.concatenate %21, %101, %21 in 1 : vector<32x17xbf16>, vector<32x256xbf16>, vector<32x17xbf16> -> vector<32x290xbf16>
      %cst_41 = arith.constant 0.000000e+00 : f32
      %103 = vector.broadcast %cst_41 : f32 to vector<32x256xf32>
      %104 = vector.extract_strided_slice %102 {offsets = [0, 0], sizes = [32, 256], strides = [1, 1]} : vector<32x290xbf16> to vector<32x256xbf16>
      %c0_i32_42 = arith.constant 0 : i32
      %105 = arith.sitofp %c0_i32_42 : i32 to bf16
      %106 = vector.shape_cast %18 : vector<1x256xi1> to vector<1x256xi1>
      %107 = vector.broadcast %106 : vector<1x256xi1> to vector<32x256xi1>
      %108 = vector.broadcast %105 : bf16 to vector<32x256xbf16>
      %109 = arith.select %107, %104, %108 : vector<32x256xi1>, vector<32x256xbf16>
      %110 = vector.extract_strided_slice %102 {offsets = [0, 1], sizes = [32, 256], strides = [1, 1]} : vector<32x290xbf16> to vector<32x256xbf16>
      %111 = vector.extract_strided_slice %102 {offsets = [0, 2], sizes = [32, 256], strides = [1, 1]} : vector<32x290xbf16> to vector<32x256xbf16>
      %c0_i32_43 = arith.constant 0 : i32
      %112 = arith.sitofp %c0_i32_43 : i32 to bf16
      %113 = vector.shape_cast %20 : vector<1x256xi1> to vector<1x256xi1>
      %114 = vector.broadcast %113 : vector<1x256xi1> to vector<32x256xi1>
      %115 = vector.broadcast %112 : bf16 to vector<32x256xbf16>
      %116 = arith.select %114, %111, %115 : vector<32x256xi1>, vector<32x256xbf16>
      %117 = tpu.concatenate %109, %110, %116 in 0 : vector<32x256xbf16>, vector<32x256xbf16>, vector<32x256xbf16> -> vector<96x256xbf16>
      %118 = vector.extract_strided_slice %97 {offsets = [0, 0, 0], sizes = [1, 32, 96], strides = [1, 1, 1]} : vector<3x32x96xbf16> to vector<1x32x96xbf16>
      %119 = vector.shape_cast %118 : vector<1x32x96xbf16> to vector<32x96xbf16>
      %cst_44 = arith.constant dense<0.000000e+00> : vector<32x256xf32>
      %120 = tpu.matmul %119, %117, %cst_44 {dimension_numbers = #tpu.dot_dimension_numbers<[1], [0], [0], [1], [0, 0, 1, 1], [], []>} : vector<32x96xbf16>, vector<96x256xbf16>, vector<32x256xf32> -> vector<32x256xf32>
      %121 = arith.addf %103, %120 : vector<32x256xf32>
      %122 = vector.extract_strided_slice %102 {offsets = [0, 16], sizes = [32, 256], strides = [1, 1]} : vector<32x290xbf16> to vector<32x256xbf16>
      %c0_i32_45 = arith.constant 0 : i32
      %123 = arith.sitofp %c0_i32_45 : i32 to bf16
      %124 = vector.shape_cast %18 : vector<1x256xi1> to vector<1x256xi1>
      %125 = vector.broadcast %124 : vector<1x256xi1> to vector<32x256xi1>
      %126 = vector.broadcast %123 : bf16 to vector<32x256xbf16>
      %127 = arith.select %125, %122, %126 : vector<32x256xi1>, vector<32x256xbf16>
      %128 = vector.extract_strided_slice %102 {offsets = [0, 17], sizes = [32, 256], strides = [1, 1]} : vector<32x290xbf16> to vector<32x256xbf16>
      %129 = vector.extract_strided_slice %102 {offsets = [0, 18], sizes = [32, 256], strides = [1, 1]} : vector<32x290xbf16> to vector<32x256xbf16>
      %c0_i32_46 = arith.constant 0 : i32
      %130 = arith.sitofp %c0_i32_46 : i32 to bf16
      %131 = vector.shape_cast %20 : vector<1x256xi1> to vector<1x256xi1>
      %132 = vector.broadcast %131 : vector<1x256xi1> to vector<32x256xi1>
      %133 = vector.broadcast %130 : bf16 to vector<32x256xbf16>
      %134 = arith.select %132, %129, %133 : vector<32x256xi1>, vector<32x256xbf16>
      %135 = tpu.concatenate %127, %128, %134 in 0 : vector<32x256xbf16>, vector<32x256xbf16>, vector<32x256xbf16> -> vector<96x256xbf16>
      %136 = vector.extract_strided_slice %97 {offsets = [1, 0, 0], sizes = [1, 32, 96], strides = [1, 1, 1]} : vector<3x32x96xbf16> to vector<1x32x96xbf16>
      %137 = vector.shape_cast %136 : vector<1x32x96xbf16> to vector<32x96xbf16>
      %cst_47 = arith.constant dense<0.000000e+00> : vector<32x256xf32>
      %138 = tpu.matmul %137, %135, %cst_47 {dimension_numbers = #tpu.dot_dimension_numbers<[1], [0], [0], [1], [0, 0, 1, 1], [], []>} : vector<32x96xbf16>, vector<96x256xbf16>, vector<32x256xf32> -> vector<32x256xf32>
      %139 = arith.addf %121, %138 : vector<32x256xf32>
      %140 = vector.extract_strided_slice %102 {offsets = [0, 32], sizes = [32, 256], strides = [1, 1]} : vector<32x290xbf16> to vector<32x256xbf16>
      %c0_i32_48 = arith.constant 0 : i32
      %141 = arith.sitofp %c0_i32_48 : i32 to bf16
      %142 = vector.shape_cast %18 : vector<1x256xi1> to vector<1x256xi1>
      %143 = vector.broadcast %142 : vector<1x256xi1> to vector<32x256xi1>
      %144 = vector.broadcast %141 : bf16 to vector<32x256xbf16>
      %145 = arith.select %143, %140, %144 : vector<32x256xi1>, vector<32x256xbf16>
      %146 = vector.extract_strided_slice %102 {offsets = [0, 33], sizes = [32, 256], strides = [1, 1]} : vector<32x290xbf16> to vector<32x256xbf16>
      %147 = vector.extract_strided_slice %102 {offsets = [0, 34], sizes = [32, 256], strides = [1, 1]} : vector<32x290xbf16> to vector<32x256xbf16>
      %c0_i32_49 = arith.constant 0 : i32
      %148 = arith.sitofp %c0_i32_49 : i32 to bf16
      %149 = vector.shape_cast %20 : vector<1x256xi1> to vector<1x256xi1>
      %150 = vector.broadcast %149 : vector<1x256xi1> to vector<32x256xi1>
      %151 = vector.broadcast %148 : bf16 to vector<32x256xbf16>
      %152 = arith.select %150, %147, %151 : vector<32x256xi1>, vector<32x256xbf16>
      %153 = tpu.concatenate %145, %146, %152 in 0 : vector<32x256xbf16>, vector<32x256xbf16>, vector<32x256xbf16> -> vector<96x256xbf16>
      %154 = vector.extract_strided_slice %97 {offsets = [2, 0, 0], sizes = [1, 32, 96], strides = [1, 1, 1]} : vector<3x32x96xbf16> to vector<1x32x96xbf16>
      %155 = vector.shape_cast %154 : vector<1x32x96xbf16> to vector<32x96xbf16>
      %cst_50 = arith.constant dense<0.000000e+00> : vector<32x256xf32>
      %156 = tpu.matmul %155, %153, %cst_50 {dimension_numbers = #tpu.dot_dimension_numbers<[1], [0], [0], [1], [0, 0, 1, 1], [], []>} : vector<32x96xbf16>, vector<96x256xbf16>, vector<32x256xf32> -> vector<32x256xf32>
      %157 = arith.addf %139, %156 : vector<32x256xf32>
      %158 = vector.broadcast %100 : vector<32x1xf32> to vector<32x256xf32>
      %159 = arith.addf %157, %158 : vector<32x256xf32>
      %cst_51 = arith.constant 0.000000e+00 : f32
      %160 = vector.broadcast %cst_51 : f32 to vector<32x256xf32>
      %161 = arith.maximumf %159, %160 : vector<32x256xf32>
      %162 = arith.index_cast %arg14 : i32 to index
      %c0_52 = arith.constant 0 : index
      %c0_53 = arith.constant 0 : index
      %c0_54 = arith.constant 0 : index
      %163 = vector.load %arg4[%162, %c0_52, %c0_53, %c0_54] : memref<2x3x32x96xbf16, #tpu.memory_space<vmem>>, vector<1x3x32x96xbf16>
      %164 = vector.shape_cast %163 : vector<1x3x32x96xbf16> to vector<3x32x96xbf16>
      %165 = arith.index_cast %arg14 : i32 to index
      %c0_55 = arith.constant 0 : index
      %c0_56 = arith.constant 0 : index
      %166 = vector.load %arg5[%165, %c0_55, %c0_56] : memref<2x32x1xf32, #tpu.memory_space<vmem>>, vector<1x32x1xf32>
      %167 = vector.shape_cast %166 : vector<1x32x1xf32> to vector<32x1xf32>
      %168 = arith.truncf %161 : vector<32x256xf32> to vector<32x256xbf16>
      %169 = tpu.concatenate %21, %168, %21 in 1 : vector<32x17xbf16>, vector<32x256xbf16>, vector<32x17xbf16> -> vector<32x290xbf16>
      %cst_57 = arith.constant 0.000000e+00 : f32
      %170 = vector.broadcast %cst_57 : f32 to vector<32x256xf32>
      %171 = vector.extract_strided_slice %169 {offsets = [0, 0], sizes = [32, 256], strides = [1, 1]} : vector<32x290xbf16> to vector<32x256xbf16>
      %c0_i32_58 = arith.constant 0 : i32
      %172 = arith.sitofp %c0_i32_58 : i32 to bf16
      %173 = vector.shape_cast %18 : vector<1x256xi1> to vector<1x256xi1>
      %174 = vector.broadcast %173 : vector<1x256xi1> to vector<32x256xi1>
      %175 = vector.broadcast %172 : bf16 to vector<32x256xbf16>
      %176 = arith.select %174, %171, %175 : vector<32x256xi1>, vector<32x256xbf16>
      %177 = vector.extract_strided_slice %169 {offsets = [0, 1], sizes = [32, 256], strides = [1, 1]} : vector<32x290xbf16> to vector<32x256xbf16>
      %178 = vector.extract_strided_slice %169 {offsets = [0, 2], sizes = [32, 256], strides = [1, 1]} : vector<32x290xbf16> to vector<32x256xbf16>
      %c0_i32_59 = arith.constant 0 : i32
      %179 = arith.sitofp %c0_i32_59 : i32 to bf16
      %180 = vector.shape_cast %20 : vector<1x256xi1> to vector<1x256xi1>
      %181 = vector.broadcast %180 : vector<1x256xi1> to vector<32x256xi1>
      %182 = vector.broadcast %179 : bf16 to vector<32x256xbf16>
      %183 = arith.select %181, %178, %182 : vector<32x256xi1>, vector<32x256xbf16>
      %184 = tpu.concatenate %176, %177, %183 in 0 : vector<32x256xbf16>, vector<32x256xbf16>, vector<32x256xbf16> -> vector<96x256xbf16>
      %185 = vector.extract_strided_slice %164 {offsets = [0, 0, 0], sizes = [1, 32, 96], strides = [1, 1, 1]} : vector<3x32x96xbf16> to vector<1x32x96xbf16>
      %186 = vector.shape_cast %185 : vector<1x32x96xbf16> to vector<32x96xbf16>
      %cst_60 = arith.constant dense<0.000000e+00> : vector<32x256xf32>
      %187 = tpu.matmul %186, %184, %cst_60 {dimension_numbers = #tpu.dot_dimension_numbers<[1], [0], [0], [1], [0, 0, 1, 1], [], []>} : vector<32x96xbf16>, vector<96x256xbf16>, vector<32x256xf32> -> vector<32x256xf32>
      %188 = arith.addf %170, %187 : vector<32x256xf32>
      %189 = vector.extract_strided_slice %169 {offsets = [0, 16], sizes = [32, 256], strides = [1, 1]} : vector<32x290xbf16> to vector<32x256xbf16>
      %c0_i32_61 = arith.constant 0 : i32
      %190 = arith.sitofp %c0_i32_61 : i32 to bf16
      %191 = vector.shape_cast %18 : vector<1x256xi1> to vector<1x256xi1>
      %192 = vector.broadcast %191 : vector<1x256xi1> to vector<32x256xi1>
      %193 = vector.broadcast %190 : bf16 to vector<32x256xbf16>
      %194 = arith.select %192, %189, %193 : vector<32x256xi1>, vector<32x256xbf16>
      %195 = vector.extract_strided_slice %169 {offsets = [0, 17], sizes = [32, 256], strides = [1, 1]} : vector<32x290xbf16> to vector<32x256xbf16>
      %196 = vector.extract_strided_slice %169 {offsets = [0, 18], sizes = [32, 256], strides = [1, 1]} : vector<32x290xbf16> to vector<32x256xbf16>
      %c0_i32_62 = arith.constant 0 : i32
      %197 = arith.sitofp %c0_i32_62 : i32 to bf16
      %198 = vector.shape_cast %20 : vector<1x256xi1> to vector<1x256xi1>
      %199 = vector.broadcast %198 : vector<1x256xi1> to vector<32x256xi1>
      %200 = vector.broadcast %197 : bf16 to vector<32x256xbf16>
      %201 = arith.select %199, %196, %200 : vector<32x256xi1>, vector<32x256xbf16>
      %202 = tpu.concatenate %194, %195, %201 in 0 : vector<32x256xbf16>, vector<32x256xbf16>, vector<32x256xbf16> -> vector<96x256xbf16>
      %203 = vector.extract_strided_slice %164 {offsets = [1, 0, 0], sizes = [1, 32, 96], strides = [1, 1, 1]} : vector<3x32x96xbf16> to vector<1x32x96xbf16>
      %204 = vector.shape_cast %203 : vector<1x32x96xbf16> to vector<32x96xbf16>
      %cst_63 = arith.constant dense<0.000000e+00> : vector<32x256xf32>
      %205 = tpu.matmul %204, %202, %cst_63 {dimension_numbers = #tpu.dot_dimension_numbers<[1], [0], [0], [1], [0, 0, 1, 1], [], []>} : vector<32x96xbf16>, vector<96x256xbf16>, vector<32x256xf32> -> vector<32x256xf32>
      %206 = arith.addf %188, %205 : vector<32x256xf32>
      %207 = vector.extract_strided_slice %169 {offsets = [0, 32], sizes = [32, 256], strides = [1, 1]} : vector<32x290xbf16> to vector<32x256xbf16>
      %c0_i32_64 = arith.constant 0 : i32
      %208 = arith.sitofp %c0_i32_64 : i32 to bf16
      %209 = vector.shape_cast %18 : vector<1x256xi1> to vector<1x256xi1>
      %210 = vector.broadcast %209 : vector<1x256xi1> to vector<32x256xi1>
      %211 = vector.broadcast %208 : bf16 to vector<32x256xbf16>
      %212 = arith.select %210, %207, %211 : vector<32x256xi1>, vector<32x256xbf16>
      %213 = vector.extract_strided_slice %169 {offsets = [0, 33], sizes = [32, 256], strides = [1, 1]} : vector<32x290xbf16> to vector<32x256xbf16>
      %214 = vector.extract_strided_slice %169 {offsets = [0, 34], sizes = [32, 256], strides = [1, 1]} : vector<32x290xbf16> to vector<32x256xbf16>
      %c0_i32_65 = arith.constant 0 : i32
      %215 = arith.sitofp %c0_i32_65 : i32 to bf16
      %216 = vector.shape_cast %20 : vector<1x256xi1> to vector<1x256xi1>
      %217 = vector.broadcast %216 : vector<1x256xi1> to vector<32x256xi1>
      %218 = vector.broadcast %215 : bf16 to vector<32x256xbf16>
      %219 = arith.select %217, %214, %218 : vector<32x256xi1>, vector<32x256xbf16>
      %220 = tpu.concatenate %212, %213, %219 in 0 : vector<32x256xbf16>, vector<32x256xbf16>, vector<32x256xbf16> -> vector<96x256xbf16>
      %221 = vector.extract_strided_slice %164 {offsets = [2, 0, 0], sizes = [1, 32, 96], strides = [1, 1, 1]} : vector<3x32x96xbf16> to vector<1x32x96xbf16>
      %222 = vector.shape_cast %221 : vector<1x32x96xbf16> to vector<32x96xbf16>
      %cst_66 = arith.constant dense<0.000000e+00> : vector<32x256xf32>
      %223 = tpu.matmul %222, %220, %cst_66 {dimension_numbers = #tpu.dot_dimension_numbers<[1], [0], [0], [1], [0, 0, 1, 1], [], []>} : vector<32x96xbf16>, vector<96x256xbf16>, vector<32x256xf32> -> vector<32x256xf32>
      %224 = arith.addf %206, %223 : vector<32x256xf32>
      %225 = vector.broadcast %167 : vector<32x1xf32> to vector<32x256xf32>
      %226 = arith.addf %224, %225 : vector<32x256xf32>
      %cst_67 = arith.constant dense<0.000000e+00> : vector<32xf32>
      %227 = vector.multi_reduction <add>, %226, %cst_67 [1] : vector<32x256xf32> to vector<32xf32>
      %228 = vector.shape_cast %227 : vector<32xf32> to vector<32x1xf32>
      %cst_68 = arith.constant 3.906250e-03 : f32
      %229 = vector.broadcast %cst_68 : f32 to vector<32x1xf32>
      %230 = arith.mulf %228, %229 : vector<32x1xf32>
      %231 = arith.index_cast %arg14 : i32 to index
      %c0_69 = arith.constant 0 : index
      %c0_70 = arith.constant 0 : index
      %232 = vector.load %arg6[%231, %c0_69, %c0_70] : memref<2x32x4xf32, #tpu.memory_space<vmem>>, vector<1x32x4xf32>
      %233 = vector.shape_cast %232 : vector<1x32x4xf32> to vector<32x4xf32>
      %234 = vector.broadcast %230 : vector<32x1xf32> to vector<32x4xf32>
      %235 = arith.mulf %234, %233 : vector<32x4xf32>
      %cst_71 = arith.constant dense<0.000000e+00> : vector<4xf32>
      %236 = vector.multi_reduction <add>, %235, %cst_71 [0] : vector<32x4xf32> to vector<4xf32>
      %237 = vector.shape_cast %236 : vector<4xf32> to vector<1x4xf32>
      %238 = arith.index_cast %arg14 : i32 to index
      %c0_72 = arith.constant 0 : index
      %c0_73 = arith.constant 0 : index
      %239 = vector.load %arg7[%238, %c0_72, %c0_73] : memref<2x1x4xf32, #tpu.memory_space<vmem>>, vector<1x1x4xf32>
      %240 = vector.shape_cast %239 : vector<1x1x4xf32> to vector<1x4xf32>
      %241 = arith.addf %237, %240 : vector<1x4xf32>
      %cst_74 = arith.constant 0.000000e+00 : f32
      %242 = vector.broadcast %cst_74 : f32 to vector<1x4xf32>
      %243 = arith.maximumf %241, %242 : vector<1x4xf32>
      %244 = arith.index_cast %arg14 : i32 to index
      %c0_75 = arith.constant 0 : index
      %c0_76 = arith.constant 0 : index
      %245 = vector.load %arg8[%244, %c0_75, %c0_76] : memref<2x32x4xf32, #tpu.memory_space<vmem>>, vector<1x32x4xf32>
      %246 = vector.shape_cast %245 : vector<1x32x4xf32> to vector<32x4xf32>
      %247 = vector.broadcast %243 : vector<1x4xf32> to vector<32x4xf32>
      %248 = arith.mulf %247, %246 : vector<32x4xf32>
      %cst_77 = arith.constant dense<0.000000e+00> : vector<32xf32>
      %249 = vector.multi_reduction <add>, %248, %cst_77 [1] : vector<32x4xf32> to vector<32xf32>
      %250 = vector.shape_cast %249 : vector<32xf32> to vector<32x1xf32>
      %251 = arith.index_cast %arg14 : i32 to index
      %c0_78 = arith.constant 0 : index
      %c0_79 = arith.constant 0 : index
      %252 = vector.load %arg9[%251, %c0_78, %c0_79] : memref<2x32x1xf32, #tpu.memory_space<vmem>>, vector<1x32x1xf32>
      %253 = vector.shape_cast %252 : vector<1x32x1xf32> to vector<32x1xf32>
      %254 = arith.addf %250, %253 : vector<32x1xf32>
      %255 = arith.negf %254 : vector<32x1xf32>
      %256 = math.exp %255 : vector<32x1xf32>
      %cst_80 = arith.constant 1.000000e+00 : f32
      %257 = vector.broadcast %cst_80 : f32 to vector<32x1xf32>
      %258 = arith.addf %257, %256 : vector<32x1xf32>
      %259 = arith.divf %257, %258 : vector<32x1xf32>
      %260 = vector.broadcast %259 : vector<32x1xf32> to vector<32x256xf32>
      %261 = arith.mulf %226, %260 : vector<32x256xf32>
      %c0_81 = arith.constant 0 : index
      %c0_82 = arith.constant 0 : index
      %262 = vector.load %arg13[%c0_81, %c0_82] : memref<32x256xf32, #tpu.memory_space<vmem>>, vector<32x256xf32>
      %263 = arith.addf %261, %262 : vector<32x256xf32>
      %c0_83 = arith.constant 0 : index
      %c0_84 = arith.constant 0 : index
      %264 = vector.load %arg13[%c0_83, %c0_84] : memref<32x256xf32, #tpu.memory_space<vmem>>, vector<32x256xf32>
      tpu.vector_store %arg13[%c0_83, %c0_84], %263 {strides = array<i32>} : memref<32x256xf32, #tpu.memory_space<vmem>>, vector<32x256xf32>,
    }
    %c2_i32_10 = arith.constant 2 : i32
    %c0_11 = arith.constant 0 : index
    %c0_12 = arith.constant 0 : index
    %26 = vector.load %arg13[%c0_11, %c0_12] : memref<32x256xf32, #tpu.memory_space<vmem>>, vector<32x256xf32>
    %c0_13 = arith.constant 0 : index
    %c0_14 = arith.constant 0 : index
    %c0_15 = arith.constant 0 : index
    %27 = vector.load %arg10[%c0_13, %c0_14, %c0_15] : memref<3x32x96xbf16, #tpu.memory_space<vmem>>, vector<3x32x96xbf16>
    %c0_16 = arith.constant 0 : index
    %c0_17 = arith.constant 0 : index
    %28 = vector.load %arg11[%c0_16, %c0_17] : memref<32x1xf32, #tpu.memory_space<vmem>>, vector<32x1xf32>
    %29 = arith.truncf %26 : vector<32x256xf32> to vector<32x256xbf16>
    %30 = tpu.concatenate %21, %29, %21 in 1 : vector<32x17xbf16>, vector<32x256xbf16>, vector<32x17xbf16> -> vector<32x290xbf16>
    %cst_18 = arith.constant 0.000000e+00 : f32
    %31 = vector.broadcast %cst_18 : f32 to vector<32x256xf32>
    %32 = vector.extract_strided_slice %30 {offsets = [0, 0], sizes = [32, 256], strides = [1, 1]} : vector<32x290xbf16> to vector<32x256xbf16>
    %c0_i32_19 = arith.constant 0 : i32
    %33 = arith.sitofp %c0_i32_19 : i32 to bf16
    %34 = vector.shape_cast %18 : vector<1x256xi1> to vector<1x256xi1>
    %35 = vector.broadcast %34 : vector<1x256xi1> to vector<32x256xi1>
    %36 = vector.broadcast %33 : bf16 to vector<32x256xbf16>
    %37 = arith.select %35, %32, %36 : vector<32x256xi1>, vector<32x256xbf16>
    %38 = vector.extract_strided_slice %30 {offsets = [0, 1], sizes = [32, 256], strides = [1, 1]} : vector<32x290xbf16> to vector<32x256xbf16>
    %39 = vector.extract_strided_slice %30 {offsets = [0, 2], sizes = [32, 256], strides = [1, 1]} : vector<32x290xbf16> to vector<32x256xbf16>
    %c0_i32_20 = arith.constant 0 : i32
    %40 = arith.sitofp %c0_i32_20 : i32 to bf16
    %41 = vector.shape_cast %20 : vector<1x256xi1> to vector<1x256xi1>
    %42 = vector.broadcast %41 : vector<1x256xi1> to vector<32x256xi1>
    %43 = vector.broadcast %40 : bf16 to vector<32x256xbf16>
    %44 = arith.select %42, %39, %43 : vector<32x256xi1>, vector<32x256xbf16>
    %45 = tpu.concatenate %37, %38, %44 in 0 : vector<32x256xbf16>, vector<32x256xbf16>, vector<32x256xbf16> -> vector<96x256xbf16>
    %46 = vector.extract_strided_slice %27 {offsets = [0, 0, 0], sizes = [1, 32, 96], strides = [1, 1, 1]} : vector<3x32x96xbf16> to vector<1x32x96xbf16>
    %47 = vector.shape_cast %46 : vector<1x32x96xbf16> to vector<32x96xbf16>
    %cst_21 = arith.constant dense<0.000000e+00> : vector<32x256xf32>
    %48 = tpu.matmul %47, %45, %cst_21 {dimension_numbers = #tpu.dot_dimension_numbers<[1], [0], [0], [1], [0, 0, 1, 1], [], []>} : vector<32x96xbf16>, vector<96x256xbf16>, vector<32x256xf32> -> vector<32x256xf32>
    %49 = arith.addf %31, %48 : vector<32x256xf32>
    %50 = vector.extract_strided_slice %30 {offsets = [0, 16], sizes = [32, 256], strides = [1, 1]} : vector<32x290xbf16> to vector<32x256xbf16>
    %c0_i32_22 = arith.constant 0 : i32
    %51 = arith.sitofp %c0_i32_22 : i32 to bf16
    %52 = vector.shape_cast %18 : vector<1x256xi1> to vector<1x256xi1>
    %53 = vector.broadcast %52 : vector<1x256xi1> to vector<32x256xi1>
    %54 = vector.broadcast %51 : bf16 to vector<32x256xbf16>
    %55 = arith.select %53, %50, %54 : vector<32x256xi1>, vector<32x256xbf16>
    %56 = vector.extract_strided_slice %30 {offsets = [0, 17], sizes = [32, 256], strides = [1, 1]} : vector<32x290xbf16> to vector<32x256xbf16>
    %57 = vector.extract_strided_slice %30 {offsets = [0, 18], sizes = [32, 256], strides = [1, 1]} : vector<32x290xbf16> to vector<32x256xbf16>
    %c0_i32_23 = arith.constant 0 : i32
    %58 = arith.sitofp %c0_i32_23 : i32 to bf16
    %59 = vector.shape_cast %20 : vector<1x256xi1> to vector<1x256xi1>
    %60 = vector.broadcast %59 : vector<1x256xi1> to vector<32x256xi1>
    %61 = vector.broadcast %58 : bf16 to vector<32x256xbf16>
    %62 = arith.select %60, %57, %61 : vector<32x256xi1>, vector<32x256xbf16>
    %63 = tpu.concatenate %55, %56, %62 in 0 : vector<32x256xbf16>, vector<32x256xbf16>, vector<32x256xbf16> -> vector<96x256xbf16>
    %64 = vector.extract_strided_slice %27 {offsets = [1, 0, 0], sizes = [1, 32, 96], strides = [1, 1, 1]} : vector<3x32x96xbf16> to vector<1x32x96xbf16>
    %65 = vector.shape_cast %64 : vector<1x32x96xbf16> to vector<32x96xbf16>
    %cst_24 = arith.constant dense<0.000000e+00> : vector<32x256xf32>
    %66 = tpu.matmul %65, %63, %cst_24 {dimension_numbers = #tpu.dot_dimension_numbers<[1], [0], [0], [1], [0, 0, 1, 1], [], []>} : vector<32x96xbf16>, vector<96x256xbf16>, vector<32x256xf32> -> vector<32x256xf32>
    %67 = arith.addf %49, %66 : vector<32x256xf32>
    %68 = vector.extract_strided_slice %30 {offsets = [0, 32], sizes = [32, 256], strides = [1, 1]} : vector<32x290xbf16> to vector<32x256xbf16>
    %c0_i32_25 = arith.constant 0 : i32
    %69 = arith.sitofp %c0_i32_25 : i32 to bf16
    %70 = vector.shape_cast %18 : vector<1x256xi1> to vector<1x256xi1>
    %71 = vector.broadcast %70 : vector<1x256xi1> to vector<32x256xi1>
    %72 = vector.broadcast %69 : bf16 to vector<32x256xbf16>
    %73 = arith.select %71, %68, %72 : vector<32x256xi1>, vector<32x256xbf16>
    %74 = vector.extract_strided_slice %30 {offsets = [0, 33], sizes = [32, 256], strides = [1, 1]} : vector<32x290xbf16> to vector<32x256xbf16>
    %75 = vector.extract_strided_slice %30 {offsets = [0, 34], sizes = [32, 256], strides = [1, 1]} : vector<32x290xbf16> to vector<32x256xbf16>
    %c0_i32_26 = arith.constant 0 : i32
    %76 = arith.sitofp %c0_i32_26 : i32 to bf16
    %77 = vector.shape_cast %20 : vector<1x256xi1> to vector<1x256xi1>
    %78 = vector.broadcast %77 : vector<1x256xi1> to vector<32x256xi1>
    %79 = vector.broadcast %76 : bf16 to vector<32x256xbf16>
    %80 = arith.select %78, %75, %79 : vector<32x256xi1>, vector<32x256xbf16>
    %81 = tpu.concatenate %73, %74, %80 in 0 : vector<32x256xbf16>, vector<32x256xbf16>, vector<32x256xbf16> -> vector<96x256xbf16>
    %82 = vector.extract_strided_slice %27 {offsets = [2, 0, 0], sizes = [1, 32, 96], strides = [1, 1, 1]} : vector<3x32x96xbf16> to vector<1x32x96xbf16>
    %83 = vector.shape_cast %82 : vector<1x32x96xbf16> to vector<32x96xbf16>
    %cst_27 = arith.constant dense<0.000000e+00> : vector<32x256xf32>
    %84 = tpu.matmul %83, %81, %cst_27 {dimension_numbers = #tpu.dot_dimension_numbers<[1], [0], [0], [1], [0, 0, 1, 1], [], []>} : vector<32x96xbf16>, vector<96x256xbf16>, vector<32x256xf32> -> vector<32x256xf32>
    %85 = arith.addf %67, %84 : vector<32x256xf32>
    %86 = vector.broadcast %28 : vector<32x1xf32> to vector<32x256xf32>
    %87 = arith.addf %85, %86 : vector<32x256xf32>
    %c0_28 = arith.constant 0 : index
    %c0_29 = arith.constant 0 : index
    %c0_30 = arith.constant 0 : index
    %88 = vector.load %arg1[%c0_28, %c0_29, %c0_30] : memref<1x32x256xf32, #tpu.memory_space<vmem>>, vector<1x32x256xf32>
    %89 = vector.shape_cast %88 : vector<1x32x256xf32> to vector<32x256xf32>
    %90 = arith.addf %87, %89 : vector<32x256xf32>
    %c0_31 = arith.constant 0 : index
    %c0_32 = arith.constant 0 : index
    %c0_33 = arith.constant 0 : index
    %91 = vector.load %arg12[%c0_31, %c0_32, %c0_33] : memref<1x32x256xf32, #tpu.memory_space<vmem>>, vector<1x32x256xf32>
    %92 = vector.shape_cast %91 : vector<1x32x256xf32> to vector<32x256xf32>
    %93 = vector.shape_cast %90 : vector<32x256xf32> to vector<1x32x256xf32>
    tpu.vector_store %arg12[%c0_31, %c0_32, %c0_33], %93 {strides = array<i32>} : memref<1x32x256xf32, #tpu.memory_space<vmem>>, vector<1x32x256xf32>,
    return
  }
  func.func @transform_0(%arg0: i32) -> (i32, i32, i32) {
    %c0_i32 = arith.constant 0 : i32
    %c0_i32_0 = arith.constant 0 : i32
    %c0_i32_1 = arith.constant 0 : i32
    return %arg0, %c0_i32, %c0_i32_0 : i32, i32, i32
  }
  func.func @transform_1(%arg0: i32) -> (i32, i32, i32, i32) {
    %c0_i32 = arith.constant 0 : i32
    %c0_i32_0 = arith.constant 0 : i32
    %c0_i32_1 = arith.constant 0 : i32
    %c0_i32_2 = arith.constant 0 : i32
    %c0_i32_3 = arith.constant 0 : i32
    return %c0_i32, %c0_i32_0, %c0_i32_1, %c0_i32_2 : i32, i32, i32, i32
  }
  func.func @transform_2(%arg0: i32) -> (i32, i32, i32) {
    %c0_i32 = arith.constant 0 : i32
    %c0_i32_0 = arith.constant 0 : i32
    %c0_i32_1 = arith.constant 0 : i32
    %c0_i32_2 = arith.constant 0 : i32
    return %c0_i32, %c0_i32_0, %c0_i32_1 : i32, i32, i32
  }
  func.func @transform_3(%arg0: i32) -> (i32, i32, i32, i32) {
    %c0_i32 = arith.constant 0 : i32
    %c0_i32_0 = arith.constant 0 : i32
    %c0_i32_1 = arith.constant 0 : i32
    %c0_i32_2 = arith.constant 0 : i32
    %c0_i32_3 = arith.constant 0 : i32
    return %c0_i32, %c0_i32_0, %c0_i32_1, %c0_i32_2 : i32, i32, i32, i32
  }
  func.func @transform_4(%arg0: i32) -> (i32, i32, i32) {
    %c0_i32 = arith.constant 0 : i32
    %c0_i32_0 = arith.constant 0 : i32
    %c0_i32_1 = arith.constant 0 : i32
    %c0_i32_2 = arith.constant 0 : i32
    return %c0_i32, %c0_i32_0, %c0_i32_1 : i32, i32, i32
  }
  func.func @transform_5(%arg0: i32) -> (i32, i32, i32) {
    %c0_i32 = arith.constant 0 : i32
    %c0_i32_0 = arith.constant 0 : i32
    %c0_i32_1 = arith.constant 0 : i32
    %c0_i32_2 = arith.constant 0 : i32
    return %c0_i32, %c0_i32_0, %c0_i32_1 : i32, i32, i32
  }
  func.func @transform_6(%arg0: i32) -> (i32, i32, i32) {
    %c0_i32 = arith.constant 0 : i32
    %c0_i32_0 = arith.constant 0 : i32
    %c0_i32_1 = arith.constant 0 : i32
    %c0_i32_2 = arith.constant 0 : i32
    return %c0_i32, %c0_i32_0, %c0_i32_1 : i32, i32, i32
  }
  func.func @transform_7(%arg0: i32) -> (i32, i32, i32) {
    %c0_i32 = arith.constant 0 : i32
    %c0_i32_0 = arith.constant 0 : i32
    %c0_i32_1 = arith.constant 0 : i32
    %c0_i32_2 = arith.constant 0 : i32
    return %c0_i32, %c0_i32_0, %c0_i32_1 : i32, i32, i32
  }
  func.func @transform_8(%arg0: i32) -> (i32, i32, i32) {
    %c0_i32 = arith.constant 0 : i32
    %c0_i32_0 = arith.constant 0 : i32
    %c0_i32_1 = arith.constant 0 : i32
    %c0_i32_2 = arith.constant 0 : i32
    return %c0_i32, %c0_i32_0, %c0_i32_1 : i32, i32, i32
  }
  func.func @transform_9(%arg0: i32) -> (i32, i32, i32) {
    %c0_i32 = arith.constant 0 : i32
    %c0_i32_0 = arith.constant 0 : i32
    %c0_i32_1 = arith.constant 0 : i32
    %c0_i32_2 = arith.constant 0 : i32
    return %c0_i32, %c0_i32_0, %c0_i32_1 : i32, i32, i32
  }
  func.func @transform_10(%arg0: i32) -> (i32, i32) {
    %c0_i32 = arith.constant 0 : i32
    %c0_i32_0 = arith.constant 0 : i32
    %c0_i32_1 = arith.constant 0 : i32
    return %c0_i32, %c0_i32_0 : i32, i32
  }
  func.func @transform_11(%arg0: i32) -> (i32, i32, i32) {
    %c0_i32 = arith.constant 0 : i32
    %c0_i32_0 = arith.constant 0 : i32
    %c0_i32_1 = arith.constant 0 : i32
    return %arg0, %c0_i32, %c0_i32_0 : i32, i32, i32
  }
}

</mosaic_0001>

<llo_original>
// kernel: tpu_custom_call.1
$region0: #{tpu_custom_call.1}
  #allocation0 [shape = 'u32[]', space=smem, size = 0x4, offset = 0x4, fixed_abs, tag = 'smem constant byte address 0x4 - core index']
  #allocation1 [shape = 'u32[144,128]{1,0:T(1,128)}', space=vmem, size = 0x12000, scoped, tag = 'internal scratch']
  #allocation2 [shape = 'f32[32,256]{1,0:T(8,128)}', space=vmem, size = 0x8000, scoped, tag = 'scratch operand']
  %s0 = inlined_call_operand.vmem [shape: f32[2,32,256], index: 0, kind: input, shape index: {}]
  %s1 = inlined_call_operand.vmem [shape: bf16[2,3,32,96], index: 1, kind: input, shape index: {}]
  %s2 = inlined_call_operand.vmem [shape: f32[2,32,1], index: 2, kind: input, shape index: {}]
  %s3 = inlined_call_operand.vmem [shape: bf16[2,3,32,96], index: 3, kind: input, shape index: {}]
  %s4 = inlined_call_operand.vmem [shape: f32[2,32,1], index: 4, kind: input, shape index: {}]
  %s5 = inlined_call_operand.vmem [shape: f32[2,32,4], index: 5, kind: input, shape index: {}]
  %s6 = inlined_call_operand.vmem [shape: f32[2,1,4], index: 6, kind: input, shape index: {}]
  %s7 = inlined_call_operand.vmem [shape: f32[2,32,4], index: 7, kind: input, shape index: {}]
  %s8 = inlined_call_operand.vmem [shape: f32[2,32,1], index: 8, kind: input, shape index: {}]
  %s9 = inlined_call_operand.vmem [shape: bf16[3,32,96], index: 9, kind: input, shape index: {}]
  %s10 = inlined_call_operand.vmem [shape: f32[32,1], index: 10, kind: input, shape index: {}]
  %s11 = inlined_call_operand.hbm [shape: f32[2,32,256], index: 11, kind: output, shape index: {}]
  %s12 = sld [smem:[#allocation0]]
  $region84: #{tpu_custom_call.1} parent=0
    _
  %s14 = ssub.s32 1, %s12
  %s15 = scalar_select 0, %s14, %s12
  $region1: #{tpu_custom_call.1} parent=0
    #allocation3 [shape = 'u8[65536]{0}', space=vmem, size = 0x10000, scoped, tag = 'output window, operand 0']
    #allocation4 [shape = 's32[2]{0}', space=sflag, size = 0x8, scoped, tag = 'scoped memory for tpu_custom_call.1']
    %16 = vsyncpa [#allocation4], 0
    %s17 = scalar_lea.sflag [#allocation4], 1
    %18 = vsyncpa %s17, 0
    loop: start=0, step=1, limit=4
    $region2: #{tpu_custom_call.1} parent=1 // loop_pre_header
      _
    $region3: #{tpu_custom_call.1} parent=1 // loop_header
      %s20 = sphi 0, %s24
      %p21 = scmp.ge.s32.totalorder %s20, 4
      %s30 = sphi 0, %s32
      %s33 = sphi 0, %s30
      %s34 = sphi 0, %s33
      %s50 = sphi 0, %s34
      %s54 = sphi 0, %s54
      %s56 = sphi 0, %s54
      %s57 = sphi 0, %s56
      %s71 = sphi 0, %s57
      %s75 = sphi 0, %s75
      %s77 = sphi 0, %s75
      %s78 = sphi 0, %s77
      %s92 = sphi 0, %s78
      %s96 = sphi 0, %s96
      %s98 = sphi 0, %s96
      %s99 = sphi 0, %s98
      %s113 = sphi 0, %s99
      %s117 = sphi 0, %s117
      %s119 = sphi 0, %s117
      %s120 = sphi 0, %s119
      %s134 = sphi 0, %s120
      %s138 = sphi 0, %s138
      %s140 = sphi 0, %s138
      %s141 = sphi 0, %s140
      %s155 = sphi 0, %s141
      %s159 = sphi 0, %s159
      %s161 = sphi 0, %s159
      %s162 = sphi 0, %s161
      %s176 = sphi 0, %s162
      %s180 = sphi 0, %s180
      %s182 = sphi 0, %s180
      %s183 = sphi 0, %s182
      %s197 = sphi 0, %s183
      %s201 = sphi 0, %s201
      %s203 = sphi 0, %s201
      %s204 = sphi 0, %s203
      %s218 = sphi 0, %s204
      %s222 = sphi 0, %s222
      %s224 = sphi 0, %s222
      %s225 = sphi 0, %s224
      %s239 = sphi 0, %s225
      %s243 = sphi 0, %s243
      %s245 = sphi 0, %s243
      %s246 = sphi 0, %s245
      %s260 = sphi 0, %s246
      %s266 = sphi 0, %s268
      %s269 = sphi 0, %s266
      %s270 = sphi 0, %s269
      %s286 = sphi 0, %s270
    $region4: #{tpu_custom_call.1} parent=1 // loop_header_branch
      %23 = sbr.rel (%p21) target = $region8
    $region5: #{tpu_custom_call.1} parent=1 // loop_body
      %s25 = ssub.s32 %s20, 1
      %s26 = ssub.s32 %s20, 2
      %s27 = sadd.s32 %s20, 1
      %s28 = ssub.s32 %s20, %s27
      %p29 = scmp.eq.s32.totalorder %s28, 0
      %s31 = sadd.s32 %s30, 1
      %s32 = scalar_select %p29, %s30, %s31
      %p35 = pneg %p29
      %p36 = scmp.eq.s32.totalorder %s20, 1
      %p37 = por %p35, %p36
      %p38 = scmp.ne.s32.totalorder %s30, %s33
      %p39 = scmp.eq.s32.totalorder %s20, 0
      %p40 = por %p38, %p39
      %p41 = scmp.ne.s32.totalorder %s30, %s33
      %p42 = scmp.eq.s32.totalorder %s25, 1
      %p43 = por %p41, %p42
      %p44 = scmp.ne.s32.totalorder %s33, %s34
      %p45 = scmp.eq.s32.totalorder %s25, 0
      %p46 = por %p44, %p45
      %p47 = scmp.ne.s32.totalorder %s33, %s34
      %p48 = scmp.eq.s32.totalorder %s26, 1
      %p49 = por %p47, %p48
      %p51 = scmp.ne.s32.totalorder %s34, %s50
      %p52 = scmp.eq.s32.totalorder %s26, 0
      %p53 = por %p51, %p52
      %s55 = sadd.s32 %s54, 1
      %p58 = scmp.eq.s32.totalorder %s20, 1
      %p59 = scmp.ne.s32.totalorder %s54, %s56
      %p60 = scmp.eq.s32.totalorder %s20, 0
      %p61 = por %p59, %p60
      %p62 = scmp.ne.s32.totalorder %s54, %s56
      %p63 = scmp.eq.s32.totalorder %s25, 1
      %p64 = por %p62, %p63
      %p65 = scmp.ne.s32.totalorder %s56, %s57
      %p66 = scmp.eq.s32.totalorder %s25, 0
      %p67 = por %p65, %p66
      %p68 = scmp.ne.s32.totalorder %s56, %s57
      %p69 = scmp.eq.s32.totalorder %s26, 1
      %p70 = por %p68, %p69
      %p72 = scmp.ne.s32.totalorder %s57, %s71
      %p73 = scmp.eq.s32.totalorder %s26, 0
      %p74 = por %p72, %p73
      %s76 = sadd.s32 %s75, 1
      %p79 = scmp.eq.s32.totalorder %s20, 1
      %p80 = scmp.ne.s32.totalorder %s75, %s77
      %p81 = scmp.eq.s32.totalorder %s20, 0
      %p82 = por %p80, %p81
      %p83 = scmp.ne.s32.totalorder %s75, %s77
      %p84 = scmp.eq.s32.totalorder %s25, 1
      %p85 = por %p83, %p84
      %p86 = scmp.ne.s32.totalorder %s77, %s78
      %p87 = scmp.eq.s32.totalorder %s25, 0
      %p88 = por %p86, %p87
      %p89 = scmp.ne.s32.totalorder %s77, %s78
      %p90 = scmp.eq.s32.totalorder %s26, 1
      %p91 = por %p89, %p90
      %p93 = scmp.ne.s32.totalorder %s78, %s92
      %p94 = scmp.eq.s32.totalorder %s26, 0
      %p95 = por %p93, %p94
      %s97 = sadd.s32 %s96, 1
      %p100 = scmp.eq.s32.totalorder %s20, 1
      %p101 = scmp.ne.s32.totalorder %s96, %s98
      %p102 = scmp.eq.s32.totalorder %s20, 0
      %p103 = por %p101, %p102
      %p104 = scmp.ne.s32.totalorder %s96, %s98
      %p105 = scmp.eq.s32.totalorder %s25, 1
      %p106 = por %p104, %p105
      %p107 = scmp.ne.s32.totalorder %s98, %s99
      %p108 = scmp.eq.s32.totalorder %s25, 0
      %p109 = por %p107, %p108
      %p110 = scmp.ne.s32.totalorder %s98, %s99
      %p111 = scmp.eq.s32.totalorder %s26, 1
      %p112 = por %p110, %p111
      %p114 = scmp.ne.s32.totalorder %s99, %s113
      %p115 = scmp.eq.s32.totalorder %s26, 0
      %p116 = por %p114, %p115
      %s118 = sadd.s32 %s117, 1
      %p121 = scmp.eq.s32.totalorder %s20, 1
      %p122 = scmp.ne.s32.totalorder %s117, %s119
      %p123 = scmp.eq.s32.totalorder %s20, 0
      %p124 = por %p122, %p123
      %p125 = scmp.ne.s32.totalorder %s117, %s119
      %p126 = scmp.eq.s32.totalorder %s25, 1
      %p127 = por %p125, %p126
      %p128 = scmp.ne.s32.totalorder %s119, %s120
      %p129 = scmp.eq.s32.totalorder %s25, 0
      %p130 = por %p128, %p129
      %p131 = scmp.ne.s32.totalorder %s119, %s120
      %p132 = scmp.eq.s32.totalorder %s26, 1
      %p133 = por %p131, %p132
      %p135 = scmp.ne.s32.totalorder %s120, %s134
      %p136 = scmp.eq.s32.totalorder %s26, 0
      %p137 = por %p135, %p136
      %s139 = sadd.s32 %s138, 1
      %p142 = scmp.eq.s32.totalorder %s20, 1
      %p143 = scmp.ne.s32.totalorder %s138, %s140
      %p144 = scmp.eq.s32.totalorder %s20, 0
      %p145 = por %p143, %p144
      %p146 = scmp.ne.s32.totalorder %s138, %s140
      %p147 = scmp.eq.s32.totalorder %s25, 1
      %p148 = por %p146, %p147
      %p149 = scmp.ne.s32.totalorder %s140, %s141
      %p150 = scmp.eq.s32.totalorder %s25, 0
      %p151 = por %p149, %p150
      %p152 = scmp.ne.s32.totalorder %s140, %s141
      %p153 = scmp.eq.s32.totalorder %s26, 1
      %p154 = por %p152, %p153
      %p156 = scmp.ne.s32.totalorder %s141, %s155
      %p157 = scmp.eq.s32.totalorder %s26, 0
      %p158 = por %p156, %p157
      %s160 = sadd.s32 %s159, 1
      %p163 = scmp.eq.s32.totalorder %s20, 1
      %p164 = scmp.ne.s32.totalorder %s159, %s161
      %p165 = scmp.eq.s32.totalorder %s20, 0
      %p166 = por %p164, %p165
      %p167 = scmp.ne.s32.totalorder %s159, %s161
      %p168 = scmp.eq.s32.totalorder %s25, 1
      %p169 = por %p167, %p168
      %p170 = scmp.ne.s32.totalorder %s161, %s162
      %p171 = scmp.eq.s32.totalorder %s25, 0
      %p172 = por %p170, %p171
      %p173 = scmp.ne.s32.totalorder %s161, %s162
      %p174 = scmp.eq.s32.totalorder %s26, 1
      %p175 = por %p173, %p174
      %p177 = scmp.ne.s32.totalorder %s162, %s176
      %p178 = scmp.eq.s32.totalorder %s26, 0
      %p179 = por %p177, %p178
      %s181 = sadd.s32 %s180, 1
      %p184 = scmp.eq.s32.totalorder %s20, 1
      %p185 = scmp.ne.s32.totalorder %s180, %s182
      %p186 = scmp.eq.s32.totalorder %s20, 0
      %p187 = por %p185, %p186
      %p188 = scmp.ne.s32.totalorder %s180, %s182
      %p189 = scmp.eq.s32.totalorder %s25, 1
      %p190 = por %p188, %p189
      %p191 = scmp.ne.s32.totalorder %s182, %s183
      %p192 = scmp.eq.s32.totalorder %s25, 0
      %p193 = por %p191, %p192
      %p194 = scmp.ne.s32.totalorder %s182, %s183
      %p195 = scmp.eq.s32.totalorder %s26, 1
      %p196 = por %p194, %p195
      %p198 = scmp.ne.s32.totalorder %s183, %s197
      %p199 = scmp.eq.s32.totalorder %s26, 0
      %p200 = por %p198, %p199
      %s202 = sadd.s32 %s201, 1
      %p205 = scmp.eq.s32.totalorder %s20, 1
      %p206 = scmp.ne.s32.totalorder %s201, %s203
      %p207 = scmp.eq.s32.totalorder %s20, 0
      %p208 = por %p206, %p207
      %p209 = scmp.ne.s32.totalorder %s201, %s203
      %p210 = scmp.eq.s32.totalorder %s25, 1
      %p211 = por %p209, %p210
      %p212 = scmp.ne.s32.totalorder %s203, %s204
      %p213 = scmp.eq.s32.totalorder %s25, 0
      %p214 = por %p212, %p213
      %p215 = scmp.ne.s32.totalorder %s203, %s204
      %p216 = scmp.eq.s32.totalorder %s26, 1
      %p217 = por %p215, %p216
      %p219 = scmp.ne.s32.totalorder %s204, %s218
      %p220 = scmp.eq.s32.totalorder %s26, 0
      %p221 = por %p219, %p220
      %s223 = sadd.s32 %s222, 1
      %p226 = scmp.eq.s32.totalorder %s20, 1
      %p227 = scmp.ne.s32.totalorder %s222, %s224
      %p228 = scmp.eq.s32.totalorder %s20, 0
      %p229 = por %p227, %p228
      %p230 = scmp.ne.s32.totalorder %s222, %s224
      %p231 = scmp.eq.s32.totalorder %s25, 1
      %p232 = por %p230, %p231
      %p233 = scmp.ne.s32.totalorder %s224, %s225
      %p234 = scmp.eq.s32.totalorder %s25, 0
      %p235 = por %p233, %p234
      %p236 = scmp.ne.s32.totalorder %s224, %s225
      %p237 = scmp.eq.s32.totalorder %s26, 1
      %p238 = por %p236, %p237
      %p240 = scmp.ne.s32.totalorder %s225, %s239
      %p241 = scmp.eq.s32.totalorder %s26, 0
      %p242 = por %p240, %p241
      %s244 = sadd.s32 %s243, 1
      %p247 = scmp.eq.s32.totalorder %s20, 1
      %p248 = scmp.ne.s32.totalorder %s243, %s245
      %p249 = scmp.eq.s32.totalorder %s20, 0
      %p250 = por %p248, %p249
      %p251 = scmp.ne.s32.totalorder %s243, %s245
      %p252 = scmp.eq.s32.totalorder %s25, 1
      %p253 = por %p251, %p252
      %p254 = scmp.ne.s32.totalorder %s245, %s246
      %p255 = scmp.eq.s32.totalorder %s25, 0
      %p256 = por %p254, %p255
      %p257 = scmp.ne.s32.totalorder %s245, %s246
      %p258 = scmp.eq.s32.totalorder %s26, 1
      %p259 = por %p257, %p258
      %p261 = scmp.ne.s32.totalorder %s246, %s260
      %p262 = scmp.eq.s32.totalorder %s26, 0
      %p263 = por %p261, %p262
      %s264 = ssub.s32 %s20, %s27
      %p265 = scmp.eq.s32.totalorder %s264, 0
      %s267 = sadd.s32 %s266, 1
      %s268 = scalar_select %p265, %s266, %s267
      %p271 = pneg %p265
      %p272 = scmp.eq.s32.totalorder %s20, 1
      %p273 = por %p271, %p272
      %p274 = scmp.ne.s32.totalorder %s266, %s269
      %p275 = scmp.eq.s32.totalorder %s20, 0
      %p276 = por %p274, %p275
      %p277 = scmp.ne.s32.totalorder %s266, %s269
      %p278 = scmp.eq.s32.totalorder %s25, 1
      %p279 = por %p277, %p278
      %p280 = scmp.ne.s32.totalorder %s269, %s270
      %p281 = scmp.eq.s32.totalorder %s25, 0
      %p282 = por %p280, %p281
      %p283 = scmp.ne.s32.totalorder %s269, %s270
      %p284 = scmp.eq.s32.totalorder %s26, 1
      %p285 = por %p283, %p284
      %p287 = scmp.ne.s32.totalorder %s270, %s286
      %p288 = scmp.eq.s32.totalorder %s26, 0
      %p289 = por %p287, %p288
      %p290 = scmp.le.s32.totalorder 1, %s20
      %p291 = scmp.lt.s32.totalorder %s20, 3
      %p292 = pnand %p290, %p291
      %p293 = pneg %p292
      // Predicated region
      $region9: #{tpu_custom_call.1} parent=5 // pred_check
        _
      $region10: #{tpu_custom_call.1} parent=5 // pred_check_branch
        %295 = sbr.rel (%p292) target = $region12
      $region11: #{tpu_custom_call.1} parent=5 // pred_region
        %s296 = ssub.s32 %s20, 1
        // Predicated region
        $region13: #{tpu_custom_call.1} parent=11 // pred_check
          %p297 = pneg %p67
        $region14: #{tpu_custom_call.1} parent=11 // pred_check_branch
          %299 = sbr.rel (%p297) target = $region16
        $region15: #{tpu_custom_call.1} parent=11 // pred_region
          _
        $region16: #{tpu_custom_call.1} parent=11 // pred_fallthru
          _
        // Predicated region
        $region17: #{tpu_custom_call.1} parent=11 // pred_check
          %p300 = pneg %p88
        $region18: #{tpu_custom_call.1} parent=11 // pred_check_branch
          %302 = sbr.rel (%p300) target = $region20
        $region19: #{tpu_custom_call.1} parent=11 // pred_region
          _
        $region20: #{tpu_custom_call.1} parent=11 // pred_fallthru
          _
        // Predicated region
        $region21: #{tpu_custom_call.1} parent=11 // pred_check
          %p303 = pneg %p109
        $region22: #{tpu_custom_call.1} parent=11 // pred_check_branch
          %305 = sbr.rel (%p303) target = $region24
        $region23: #{tpu_custom_call.1} parent=11 // pred_region
          _
        $region24: #{tpu_custom_call.1} parent=11 // pred_fallthru
          _
        // Predicated region
        $region25: #{tpu_custom_call.1} parent=11 // pred_check
          %p306 = pneg %p130
        $region26: #{tpu_custom_call.1} parent=11 // pred_check_branch
          %308 = sbr.rel (%p306) target = $region28
        $region27: #{tpu_custom_call.1} parent=11 // pred_region
          _
        $region28: #{tpu_custom_call.1} parent=11 // pred_fallthru
          _
        // Predicated region
        $region29: #{tpu_custom_call.1} parent=11 // pred_check
          %p309 = pneg %p151
        $region30: #{tpu_custom_call.1} parent=11 // pred_check_branch
          %311 = sbr.rel (%p309) target = $region32
        $region31: #{tpu_custom_call.1} parent=11 // pred_region
          _
        $region32: #{tpu_custom_call.1} parent=11 // pred_fallthru
          _
        // Predicated region
        $region33: #{tpu_custom_call.1} parent=11 // pred_check
          %p312 = pneg %p172
        $region34: #{tpu_custom_call.1} parent=11 // pred_check_branch
          %314 = sbr.rel (%p312) target = $region36
        $region35: #{tpu_custom_call.1} parent=11 // pred_region
          _
        $region36: #{tpu_custom_call.1} parent=11 // pred_fallthru
          _
        // Predicated region
        $region37: #{tpu_custom_call.1} parent=11 // pred_check
          %p315 = pneg %p193
        $region38: #{tpu_custom_call.1} parent=11 // pred_check_branch
          %317 = sbr.rel (%p315) target = $region40
        $region39: #{tpu_custom_call.1} parent=11 // pred_region
          _
        $region40: #{tpu_custom_call.1} parent=11 // pred_fallthru
          _
        // Predicated region
        $region41: #{tpu_custom_call.1} parent=11 // pred_check
          %p318 = pneg %p214
        $region42: #{tpu_custom_call.1} parent=11 // pred_check_branch
          %320 = sbr.rel (%p318) target = $region44
        $region43: #{tpu_custom_call.1} parent=11 // pred_region
          _
        $region44: #{tpu_custom_call.1} parent=11 // pred_fallthru
          _
        // Predicated region
        $region45: #{tpu_custom_call.1} parent=11 // pred_check
          %p321 = pneg %p235
        $region46: #{tpu_custom_call.1} parent=11 // pred_check_branch
          %323 = sbr.rel (%p321) target = $region48
        $region47: #{tpu_custom_call.1} parent=11 // pred_region
          _
        $region48: #{tpu_custom_call.1} parent=11 // pred_fallthru
          _
        // Predicated region
        $region49: #{tpu_custom_call.1} parent=11 // pred_check
          %p324 = pneg %p256
        $region50: #{tpu_custom_call.1} parent=11 // pred_check_branch
          %326 = sbr.rel (%p324) target = $region52
        $region51: #{tpu_custom_call.1} parent=11 // pred_region
          _
        $region52: #{tpu_custom_call.1} parent=11 // pred_fallthru
          _
      $region12: #{tpu_custom_call.1} parent=5 // pred_fallthru
        _
      %p327 = scmp.lt.s32.totalorder %s20, 2
      // Predicated region
      $region53: #{tpu_custom_call.1} parent=5 // pred_check
        %p328 = pneg %p327
      $region54: #{tpu_custom_call.1} parent=5 // pred_check_branch
        %330 = sbr.rel (%p328) target = $region56
      $region55: #{tpu_custom_call.1} parent=5 // pred_region
        // Predicated region
        $region57: #{tpu_custom_call.1} parent=55 // pred_check
          %p331 = pneg %p40
        $region58: #{tpu_custom_call.1} parent=55 // pred_check_branch
          %333 = sbr.rel (%p331) target = $region60
        $region59: #{tpu_custom_call.1} parent=55 // pred_region
          %p334 = scmp.lt.s32.totalorder %s20, 1
          %s335 = scalar_select %p334, %s20, 1
          %s336 = smul.addr %s335, 8
          %s337 = smul.addr %s336, 8
          %s338 = scalar_lea.vmem %s0, %s337
        $region60: #{tpu_custom_call.1} parent=55 // pred_fallthru
          _
      $region56: #{tpu_custom_call.1} parent=5 // pred_fallthru
        _
      %p339 = scmp.le.s32.totalorder 1, %s20
      %p340 = scmp.lt.s32.totalorder %s20, 3
      %p341 = pnand %p339, %p340
      %p342 = pneg %p341
      // Predicated region
      $region61: #{tpu_custom_call.1} parent=5 // pred_check
        _
      $region62: #{tpu_custom_call.1} parent=5 // pred_check_branch
        %344 = sbr.rel (%p341) target = $region64
      $region63: #{tpu_custom_call.1} parent=5 // pred_region
        %s345 = ssub.s32 %s20, 1
        %p346 = scmp.lt.s32.totalorder %s25, 1
        %s347 = scalar_select %p346, %s25, 1
        %s348 = smul.addr %s347, 8
        %s349 = smul.addr %s348, 8
        %s350 = scalar_lea.vmem %s0, %s349
        %p351 = pneg %p46
        %p352 = pneg %p43
        %p353 = pneg %p67
        %p354 = pneg %p64
        %p355 = pneg %p88
        %p356 = pneg %p85
        %p357 = pneg %p109
        %p358 = pneg %p106
        %p359 = pneg %p130
        %p360 = pneg %p127
        %p361 = pneg %p151
        %p362 = pneg %p148
        %p363 = pneg %p172
        %p364 = pneg %p169
        %p365 = pneg %p193
        %p366 = pneg %p190
        %p367 = pneg %p214
        %p368 = pneg %p211
        %p369 = pneg %p235
        %p370 = pneg %p232
        %p371 = pneg %p256
        %p372 = pneg %p253
        %p373 = pneg %p282
        %p374 = pneg %p279
        %s375 = sand.u32 %s269, 1
        %s376 = scalar_lea.sflag [#allocation4], %s375
        %s377 = sand.u32 %s269, 1
        %s378 = smul.addr %s377, 64
        %s379 = scalar_lea.vmem [#allocation3], %s378
        %p380 = scmp.lt.s32.totalorder %s25, 1
        %s381 = scalar_select %p380, %s25, 1
        %s382 = smul.addr %s381, 8
        %s383 = smul.addr %s382, 8
        %s384 = scalar_lea.vmem %s0, %s383
        %v388 = vlaneseq
        %v389 = vand.u32 %v388, 127
        %v390 = vadd.s32 %v389, 128
        %vm391 = vcmp.lt.s32.totalorder %v389, 0
        %v392 = vsub.s32 0, %v389
        %v393 = vsel %vm391, %v392, %v389
        %v394 = vshrl.u32 %v393, 4
        %v395 = vand.u32 %v393, 15
        %v396 = vsub.s32 0, %v395
        %v397 = vsel %vm391, %v396, %v395
        %vm398 = vcmp.lt.s32.totalorder %v390, 0
        %v399 = vsub.s32 0, %v390
        %v400 = vsel %vm398, %v399, %v390
        %v401 = vshrl.u32 %v400, 4
        %v402 = vand.u32 %v400, 15
        %v403 = vsub.s32 0, %v402
        %v404 = vsel %vm398, %v403, %v402
        %vm405 = vcmp.ne.s32.totalorder %v397, 0
        %vm406 = vcmp.ne.s32.totalorder %v404, 0
        %vm407 = vcmp.lt.s32.totalorder %v397, 0
        %vm408 = vcmp.lt.s32.totalorder %v404, 0
        %vm409 = vmand %vm407, %vm405
        %vm410 = vmand %vm408, %vm406
        %v411 = vadd.s32 %v397, 16
        %v412 = vadd.s32 %v404, 16
        %v413 = vsel %vm409, %v411, %v397
        %v414 = vsel %vm410, %v412, %v404
        %vm415 = vcmp.ne.s32.totalorder %v413, 0
        %vm416 = vcmp.ne.s32.totalorder %v414, 0
        %vm417 = vcmp.ne.s32.totalorder %v413, 15
        %vm418 = vcmp.ne.s32.totalorder %v414, 15
        %v419 = vld [vmem:[%s384] sm:$0xff]
        %v420 = vld [vmem:[%s384 + $0x8] sm:$0xff]
        %v421 = vld [vmem:[%s384 + $0x10] sm:$0xff]
        %v422 = vld [vmem:[%s384 + $0x18] sm:$0xff]
        %v423 = vld [vmem:[%s384 + $0x20] sm:$0xff]
        %v424 = vld [vmem:[%s384 + $0x28] sm:$0xff]
        %v425 = vld [vmem:[%s384 + $0x30] sm:$0xff]
        %v426 = vld [vmem:[%s384 + $0x38] sm:$0xff]
        %427 = vst [vmem:[#allocation2] sm:$0xff] %v419
        %428 = vst [vmem:[#allocation2 + $0x8] sm:$0xff] %v420
        %429 = vst [vmem:[#allocation2 + $0x10] sm:$0xff] %v421
        %430 = vst [vmem:[#allocation2 + $0x18] sm:$0xff] %v422
        %431 = vst [vmem:[#allocation2 + $0x20] sm:$0xff] %v423
        %432 = vst [vmem:[#allocation2 + $0x28] sm:$0xff] %v424
        %433 = vst [vmem:[#allocation2 + $0x30] sm:$0xff] %v425
        %434 = vst [vmem:[#allocation2 + $0x38] sm:$0xff] %v426
        loop: start=0, step=1, limit=2
        $region65: #{tpu_custom_call.1} parent=63 // loop_pre_header
          _
        $region66: #{tpu_custom_call.1} parent=63 // loop_header
          %s436 = sphi 0, %s440
          %p437 = scmp.ge.s32.totalorder %s436, 2
        $region67: #{tpu_custom_call.1} parent=63 // loop_header_branch
          %439 = sbr.rel (%p437) target = $region71
        $region68: #{tpu_custom_call.1} parent=63 // loop_body
          %v441 = vld [vmem:[#allocation2] sm:$0xff]
          %v442 = vld [vmem:[#allocation2 + $0x8] sm:$0xff]
          %v443 = vld [vmem:[#allocation2 + $0x10] sm:$0xff]
          %v444 = vld [vmem:[#allocation2 + $0x18] sm:$0xff]
          %v445 = vld [vmem:[#allocation2 + $0x20] sm:$0xff]
          %v446 = vld [vmem:[#allocation2 + $0x28] sm:$0xff]
          %v447 = vld [vmem:[#allocation2 + $0x30] sm:$0xff]
          %v448 = vld [vmem:[#allocation2 + $0x38] sm:$0xff]
          %s449 = smul.u32 %s436, 12
          %s450 = smul.addr %s449, 4
          %s451 = scalar_lea.vmem %s1, %s450
          %v452 = vld [vmem:[%s451] sm:$0xf]
          %v453 = vld [vmem:[%s451 + $0x4] sm:$0xf]
          %v454 = vld [vmem:[%s451 + $0x8] sm:$0xf]
          %v455 = vld [vmem:[%s451 + $0xc] sm:$0xf]
          %v456 = vld [vmem:[%s451 + $0x10] sm:$0xf]
          %v457 = vld [vmem:[%s451 + $0x14] sm:$0xf]
          %v458 = vld [vmem:[%s451 + $0x18] sm:$0xf]
          %v459 = vld [vmem:[%s451 + $0x1c] sm:$0xf]
          %v460 = vld [vmem:[%s451 + $0x20] sm:$0xf]
          %v461 = vld [vmem:[%s451 + $0x24] sm:$0xf]
          %v462 = vld [vmem:[%s451 + $0x28] sm:$0xf]
          %v463 = vld [vmem:[%s451 + $0x2c] sm:$0xf]
          %s464 = smul.u32 %s436, 32
          %s465 = scalar_lea.vmem %s2, %s464
          %v466 = vld [vmem:[%s465] sm:$0xff]
          %v467 = vld [vmem:[%s465 + $0x8] sm:$0xff]
          %v468 = vld [vmem:[%s465 + $0x10] sm:$0xff]
          %v469 = vld [vmem:[%s465 + $0x18] sm:$0xff]
          %v470 = vpack.c.bf16 %v443, %v441
          %v471 = vpack.c.bf16 %v444, %v442
          %v472 = vpack.c.bf16 %v447, %v445
          %v473 = vpack.c.bf16 %v448, %v446
          %478 = vrot.lane.b32.xlu0 %v470, 17
          %v479 = vpop.permute.xlu0 %478
          %480 = vrot.lane.b32.xlu0 %v471, 17
          %v481 = vpop.permute.xlu0 %480
          %482 = vrot.lane.b32.xlu0 %v472, 17
          %v483 = vpop.permute.xlu0 %482
          %484 = vrot.lane.b32.xlu0 %v473, 17
          %v485 = vpop.permute.xlu0 %484
          %vm486 = vcmask 138240
          %v487 = vsel %vm486, %v479, %v481
          %v488 = vsel %vm486, %v483, %v485
          %vm491 = vcmask 138240
          %v494 = vsel %vm491, 0, %v479
          %v497 = vsel %vm491, 0, %v483
          %v500 = vsel %vm491, %v481, 0
          %v503 = vsel %vm491, %v485, 0
          %v505 = vsel %vm415, 1, 0
          %v506 = vsel %vm416, 1, 0
          %vm507 = vcmp.eq.s32.totalorder %v505, 1
          %vm508 = vcmp.eq.s32.totalorder %v506, 1
          %vm509 = vmpackc.low %vm508, %vm507
          %v510 = vsel %vm509, 65537, 0
          %v511 = vlaneseq
          %v512 = vshrl.u32 %v511, 7
          %v513 = vsub.s32 0, %v512
          %v514 = vrot.slane %v510, %v513
          %v515 = vlaneseq
          %v516 = vshrl.u32 %v515, 7
          %v517 = vsub.s32 4, %v516
          %v518 = vrot.slane %v510, %v517
          %vm519 = vcmp.ne.s16.totalorder %v514, 0
          %vm520 = vcmp.ne.s16.totalorder %v518, 0
          %v521 = vsel %vm519, %v494, 0
          %v522 = vsel %vm520, %v487, 0
          %v523 = vsel %vm519, %v497, 0
          %v524 = vsel %vm520, %v488, 0
          %v525 = vsel %vm417, 1, 0
          %v526 = vsel %vm418, 1, 0
          %vm527 = vcmp.eq.s32.totalorder %v525, 1
          %vm528 = vcmp.eq.s32.totalorder %v526, 1
          %vm529 = vmpackc.low %vm528, %vm527
          %v530 = vsel %vm529, 65537, 0
          %v531 = vlaneseq
          %v532 = vshrl.u32 %v531, 7
          %v533 = vsub.s32 0, %v532
          %v534 = vrot.slane %v530, %v533
          %v535 = vlaneseq
          %v536 = vshrl.u32 %v535, 7
          %v537 = vsub.s32 4, %v536
          %v538 = vrot.slane %v530, %v537
          %539 = vrot.lane.b32.xlu0 %v534, 2
          %v540 = vpop.permute.xlu0 %539
          %541 = vrot.lane.b32.xlu0 %v538, 2
          %v542 = vpop.permute.xlu0 %541
          %vm543 = vcmask 15360
          %v544 = vsel %vm543, %v540, %v542
          %vm545 = vcmp.ne.s16.totalorder %v540, 0
          %vm546 = vcmp.ne.s16.totalorder %v544, 0
          %vm547 = vcmp.ne.s16.totalorder %v542, 0
          %v548 = vsel %vm545, %v494, 0
          %v549 = vsel %vm546, %v487, 0
          %v550 = vsel %vm547, %v500, 0
          %v551 = vsel %vm545, %v497, 0
          %v552 = vsel %vm546, %v488, 0
          %v553 = vsel %vm547, %v503, 0
          %558 = vrot.lane.b32.xlu0 %v494, 127
          %v559 = vpop.permute.xlu0 %558
          %560 = vrot.lane.b32.xlu0 %v487, 127
          %v561 = vpop.permute.xlu0 %560
          %562 = vrot.lane.b32.xlu0 %v500, 127
          %v563 = vpop.permute.xlu0 %562
          %564 = vrot.lane.b32.xlu0 %v497, 127
          %v565 = vpop.permute.xlu0 %564
          %566 = vrot.lane.b32.xlu0 %v488, 127
          %v567 = vpop.permute.xlu0 %566
          %568 = vrot.lane.b32.xlu0 %v503, 127
          %v569 = vpop.permute.xlu0 %568
          %vm570 = vcmask 1039360
          %v571 = vsel %vm570, %v559, %v561
          %v572 = vsel %vm570, %v561, %v563
          %v573 = vsel %vm570, %v565, %v567
          %v574 = vsel %vm570, %v567, %v569
          %585 = vrot.lane.b32.xlu0 %v548, 126
          %v586 = vpop.permute.xlu0 %585
          %587 = vrot.lane.b32.xlu0 %v549, 126
          %v588 = vpop.permute.xlu0 %587
          %589 = vrot.lane.b32.xlu0 %v550, 126
          %v590 = vpop.permute.xlu0 %589
          %591 = vrot.lane.b32.xlu0 %v551, 126
          %v592 = vpop.permute.xlu0 %591
          %593 = vrot.lane.b32.xlu0 %v552, 126
          %v594 = vpop.permute.xlu0 %593
          %595 = vrot.lane.b32.xlu0 %v553, 126
          %v596 = vpop.permute.xlu0 %595
          %vm597 = vcmask 1031168
          %v598 = vsel %vm597, %v586, %v588
          %v599 = vsel %vm597, %v588, %v590
          %v600 = vsel %vm597, %v592, %v594
          %v601 = vsel %vm597, %v594, %v596
          %606 = vrot.lane.b32.xlu0 %v514, 16
          %v607 = vpop.permute.xlu0 %606
          %608 = vrot.lane.b32.xlu0 %v518, 16
          %v609 = vpop.permute.xlu0 %608
          %vm610 = vcmask 130048
          %v611 = vsel %vm610, %v607, %v609
          %vm612 = vcmp.ne.s16.totalorder %v607, 0
          %vm613 = vcmp.ne.s16.totalorder %v611, 0
          %vm614 = vcmp.ne.s16.totalorder %v609, 0
          %v615 = vsel %vm612, %v494, 0
          %v616 = vsel %vm613, %v487, 0
          %v617 = vsel %vm614, %v500, 0
          %v618 = vsel %vm612, %v497, 0
          %v619 = vsel %vm613, %v488, 0
          %v620 = vsel %vm614, %v503, 0
          %621 = vrot.lane.b32.xlu0 %v534, 18
          %v622 = vpop.permute.xlu0 %621
          %623 = vrot.lane.b32.xlu0 %v538, 18
          %v624 = vpop.permute.xlu0 %623
          %vm625 = vcmask 146432
          %v626 = vsel %vm625, %v622, %v624
          %vm627 = vcmp.ne.s16.totalorder %v622, 0
          %vm628 = vcmp.ne.s16.totalorder %v626, 0
          %vm629 = vcmp.ne.s16.totalorder %v624, 0
          %v630 = vsel %vm627, %v494, 0
          %v631 = vsel %vm628, %v487, 0
          %v632 = vsel %vm629, %v500, 0
          %v633 = vsel %vm627, %v497, 0
          %v634 = vsel %vm628, %v488, 0
          %v635 = vsel %vm629, %v503, 0
          %642 = vrot.lane.b32.xlu0 %v630, 126
          %v643 = vpop.permute.xlu0 %642
          %644 = vrot.lane.b32.xlu0 %v631, 126
          %v645 = vpop.permute.xlu0 %644
          %646 = vrot.lane.b32.xlu0 %v632, 126
          %v647 = vpop.permute.xlu0 %646
          %648 = vrot.lane.b32.xlu0 %v633, 126
          %v649 = vpop.permute.xlu0 %648
          %650 = vrot.lane.b32.xlu0 %v634, 126
          %v651 = vpop.permute.xlu0 %650
          %652 = vrot.lane.b32.xlu0 %v635, 126
          %v653 = vpop.permute.xlu0 %652
          %v654 = vsel %vm597, %v643, %v645
          %v655 = vsel %vm597, %v645, %v647
          %v656 = vsel %vm597, %v649, %v651
          %v657 = vsel %vm597, %v651, %v653
          %v662 = vunpack.c.l.b16 %v456
          %v663 = vunpack.c.l.b16 %v457
          %v664 = vunpack.c.l.b16 %v458
          %v665 = vunpack.c.l.b16 %v459
          %v666 = vpack.c.b16 %v663, %v662
          %v667 = vpack.c.b16 %v665, %v664
          %674 = vrot.lane.b32.xlu0 %v615, 112
          %v675 = vpop.permute.xlu0 %674
          %676 = vrot.lane.b32.xlu0 %v616, 112
          %v677 = vpop.permute.xlu0 %676
          %678 = vrot.lane.b32.xlu0 %v617, 112
          %v679 = vpop.permute.xlu0 %678
          %680 = vrot.lane.b32.xlu0 %v618, 112
          %v681 = vpop.permute.xlu0 %680
          %682 = vrot.lane.b32.xlu0 %v619, 112
          %v683 = vpop.permute.xlu0 %682
          %684 = vrot.lane.b32.xlu0 %v620, 112
          %v685 = vpop.permute.xlu0 %684
          %686 = vrot.lane.b32.xlu0 %v571, 112
          %v687 = vpop.permute.xlu0 %686
          %688 = vrot.lane.b32.xlu0 %v572, 112
          %v689 = vpop.permute.xlu0 %688
          %690 = vrot.lane.b32.xlu0 %v563, 112
          %v691 = vpop.permute.xlu0 %690
          %692 = vrot.lane.b32.xlu0 %v573, 112
          %v693 = vpop.permute.xlu0 %692
          %694 = vrot.lane.b32.xlu0 %v574, 112
          %v695 = vpop.permute.xlu0 %694
          %696 = vrot.lane.b32.xlu0 %v569, 112
          %v697 = vpop.permute.xlu0 %696
          %698 = vrot.lane.b32.xlu0 %v654, 112
          %v699 = vpop.permute.xlu0 %698
          %700 = vrot.lane.b32.xlu0 %v655, 112
          %v701 = vpop.permute.xlu0 %700
          %702 = vrot.lane.b32.xlu0 %v647, 112
          %v703 = vpop.permute.xlu0 %702
          %704 = vrot.lane.b32.xlu0 %v656, 112
          %v705 = vpop.permute.xlu0 %704
          %706 = vrot.lane.b32.xlu0 %v657, 112
          %v707 = vpop.permute.xlu0 %706
          %708 = vrot.lane.b32.xlu0 %v653, 112
          %v709 = vpop.permute.xlu0 %708
          %vm710 = vcmask 916480
          %v711 = vsel %vm710, %v675, %v677
          %v712 = vsel %vm710, %v677, %v679
          %v713 = vsel %vm710, %v681, %v683
          %v714 = vsel %vm710, %v683, %v685
          %v715 = vsel %vm710, %v687, %v689
          %v716 = vsel %vm710, %v689, %v691
          %v717 = vsel %vm710, %v693, %v695
          %v718 = vsel %vm710, %v695, %v697
          %v719 = vsel %vm710, %v699, %v701
          %v720 = vsel %vm710, %v701, %v703
          %v721 = vsel %vm710, %v705, %v707
          %v722 = vsel %vm710, %v707, %v709
          %vm735 = vcmask 785408
          %v737 = vsel %vm735, %v666, 0
          %v740 = vsel %vm735, %v667, 0
          %742 = vmatprep.subr.bf16.mxu0 %v712
          %743 = vmatpush1.bf16.msra.mxu0 %v711
          %744 = vmatprep.subr.bf16.mxu0 %v714
          %745 = vmatpush1.bf16.msra.mxu0 %v713
          %746 = vmatprep.subr.bf16.mxu0 %v716
          %747 = vmatpush1.bf16.msra.mxu0 %v715
          %748 = vmatprep.subr.bf16.mxu0 %v718
          %749 = vmatpush1.bf16.msra.mxu0 %v717
          %750 = vmatprep.subr.bf16.mxu0 %v720
          %751 = vmatpush1.bf16.msra.mxu0 %v719
          %752 = vmatprep.subr.bf16.mxu0 %v722
          %753 = vmatpush1.bf16.msra.mxu0 %v721
          %754 = vmatprep.subr.bf16.mxu0 0
          %755 = vmatpush1.bf16.msra.mxu0 0
          %756 = vmatprep.subr.bf16.mxu0 0
          %757 = vmatpush1.bf16.msra.mxu0 0
          %758 = vmatprep.subr.bf16.mxu0 0
          %759 = vmatpush1.bf16.msra.mxu0 0
          %760 = vmatprep.subr.bf16.mxu0 0
          %761 = vmatpush1.bf16.msra.mxu0 0
          %762 = vmatprep.subr.bf16.mxu0 0
          %763 = vmatpush1.bf16.msra.mxu0 0
          %764 = vmatprep.subr.bf16.mxu0 0
          %765 = vmatpush1.bf16.msra.mxu0 0
          %766 = vmatprep.subr.bf16.mxu0 0
          %767 = vmatpush1.bf16.msra.mxu0 0
          %768 = vmatprep.subr.bf16.mxu0 0
          %769 = vmatpush1.bf16.msra.mxu0 0
          %770 = vmatprep.subr.bf16.mxu0 0
          %771 = vmatpush1.bf16.msra.mxu0 0
          %772 = vmatprep.subr.bf16.mxu0 0
          %773 = vmatpush1.bf16.msra.mxu0 0
          %774 = vmatprep.mubr.bf16.mxu0 0
          %775 = vmatmul.mubr.bf16.gmra.mrb[0].mxu0 %v737
          %v776 = vpop.f32.mrb[0].mxu0
          %v777 = vadd.f32 0.0, %v776
          %v778 = vpop.f32.mrb[0].mxu0
          %v779 = vadd.f32 0.0, %v778
          %v780 = vpop.f32.mrb[0].mxu0
          %v781 = vadd.f32 0.0, %v780
          %v782 = vpop.f32.mrb[0].mxu0
          %v783 = vadd.f32 0.0, %v782
          %784 = vmatprep.mubr.bf16.mxu0 0
          %785 = vmatmul.mubr.bf16.gmra.mrb[0].mxu0 %v740
          %v786 = vpop.f32.mrb[0].mxu0
          %v787 = vadd.f32 0.0, %v786
          %v788 = vpop.f32.mrb[0].mxu0
          %v789 = vadd.f32 0.0, %v788
          %v790 = vpop.f32.mrb[0].mxu0
          %v791 = vadd.f32 0.0, %v790
          %v792 = vpop.f32.mrb[0].mxu0
          %v793 = vadd.f32 0.0, %v792
          %794 = vdwg.mxu0
          %v799 = vunpack.c.l.b16 %v452
          %v800 = vunpack.c.l.b16 %v453
          %v801 = vunpack.c.l.b16 %v454
          %v802 = vunpack.c.l.b16 %v455
          %v803 = vpack.c.b16 %v800, %v799
          %v804 = vpack.c.b16 %v802, %v801
          %v806 = vsel %vm735, %v803, 0
          %v809 = vsel %vm735, %v804, 0
          %811 = vmatprep.subr.bf16.mxu0 %v522
          %812 = vmatpush1.bf16.msra.mxu0 %v521
          %813 = vmatprep.subr.bf16.mxu0 %v524
          %814 = vmatpush1.bf16.msra.mxu0 %v523
          %815 = vmatprep.subr.bf16.mxu0 %v572
          %816 = vmatpush1.bf16.msra.mxu0 %v571
          %817 = vmatprep.subr.bf16.mxu0 %v574
          %818 = vmatpush1.bf16.msra.mxu0 %v573
          %819 = vmatprep.subr.bf16.mxu0 %v599
          %820 = vmatpush1.bf16.msra.mxu0 %v598
          %821 = vmatprep.subr.bf16.mxu0 %v601
          %822 = vmatpush1.bf16.msra.mxu0 %v600
          %823 = vmatprep.subr.bf16.mxu0 0
          %824 = vmatpush1.bf16.msra.mxu0 0
          %825 = vmatprep.subr.bf16.mxu0 0
          %826 = vmatpush1.bf16.msra.mxu0 0
          %827 = vmatprep.subr.bf16.mxu0 0
          %828 = vmatpush1.bf16.msra.mxu0 0
          %829 = vmatprep.subr.bf16.mxu0 0
          %830 = vmatpush1.bf16.msra.mxu0 0
          %831 = vmatprep.subr.bf16.mxu0 0
          %832 = vmatpush1.bf16.msra.mxu0 0
          %833 = vmatprep.subr.bf16.mxu0 0
          %834 = vmatpush1.bf16.msra.mxu0 0
          %835 = vmatprep.subr.bf16.mxu0 0
          %836 = vmatpush1.bf16.msra.mxu0 0
          %837 = vmatprep.subr.bf16.mxu0 0
          %838 = vmatpush1.bf16.msra.mxu0 0
          %839 = vmatprep.subr.bf16.mxu0 0
          %840 = vmatpush1.bf16.msra.mxu0 0
          %841 = vmatprep.subr.bf16.mxu0 0
          %842 = vmatpush1.bf16.msra.mxu0 0
          %843 = vmatprep.mubr.bf16.mxu0 0
          %844 = vmatmul.mubr.bf16.gmra.mrb[0].mxu0 %v806
          %v845 = vpop.f32.mrb[0].mxu0
          %v846 = vadd.f32 %v777, %v845
          %v847 = vpop.f32.mrb[0].mxu0
          %v848 = vadd.f32 %v779, %v847
          %v849 = vpop.f32.mrb[0].mxu0
          %v850 = vadd.f32 %v781, %v849
          %v851 = vpop.f32.mrb[0].mxu0
          %v852 = vadd.f32 %v783, %v851
          %853 = vmatprep.mubr.bf16.mxu0 0
          %854 = vmatmul.mubr.bf16.gmra.mrb[0].mxu0 %v809
          %v855 = vpop.f32.mrb[0].mxu0
          %v856 = vadd.f32 %v787, %v855
          %v857 = vpop.f32.mrb[0].mxu0
          %v858 = vadd.f32 %v789, %v857
          %v859 = vpop.f32.mrb[0].mxu0
          %v860 = vadd.f32 %v791, %v859
          %v861 = vpop.f32.mrb[0].mxu0
          %v862 = vadd.f32 %v793, %v861
          %863 = vdwg.mxu0
          %864 = vrot.lane.b32.xlu0 %v514, 32
          %v865 = vpop.permute.xlu0 %864
          %866 = vrot.lane.b32.xlu0 %v518, 32
          %v867 = vpop.permute.xlu0 %866
          %vm868 = vcmask 261120
          %v869 = vsel %vm868, %v865, %v867
          %vm870 = vcmp.ne.s16.totalorder %v865, 0
          %vm871 = vcmp.ne.s16.totalorder %v869, 0
          %vm872 = vcmp.ne.s16.totalorder %v867, 0
          %v873 = vsel %vm870, %v494, 0
          %v874 = vsel %vm871, %v487, 0
          %v875 = vsel %vm872, %v500, 0
          %v876 = vsel %vm870, %v497, 0
          %v877 = vsel %vm871, %v488, 0
          %v878 = vsel %vm872, %v503, 0
          %879 = vrot.lane.b32.xlu0 %v534, 34
          %v880 = vpop.permute.xlu0 %879
          %881 = vrot.lane.b32.xlu0 %v538, 34
          %v882 = vpop.permute.xlu0 %881
          %vm883 = vcmask 277504
          %v884 = vsel %vm883, %v880, %v882
          %vm885 = vcmp.ne.s16.totalorder %v880, 0
          %vm886 = vcmp.ne.s16.totalorder %v884, 0
          %vm887 = vcmp.ne.s16.totalorder %v882, 0
          %v888 = vsel %vm885, %v494, 0
          %v889 = vsel %vm886, %v487, 0
          %v890 = vsel %vm887, %v500, 0
          %v891 = vsel %vm885, %v497, 0
          %v892 = vsel %vm886, %v488, 0
          %v893 = vsel %vm887, %v503, 0
          %900 = vrot.lane.b32.xlu0 %v888, 126
          %v901 = vpop.permute.xlu0 %900
          %902 = vrot.lane.b32.xlu0 %v889, 126
          %v903 = vpop.permute.xlu0 %902
          %904 = vrot.lane.b32.xlu0 %v890, 126
          %v905 = vpop.permute.xlu0 %904
          %906 = vrot.lane.b32.xlu0 %v891, 126
          %v907 = vpop.permute.xlu0 %906
          %908 = vrot.lane.b32.xlu0 %v892, 126
          %v909 = vpop.permute.xlu0 %908
          %910 = vrot.lane.b32.xlu0 %v893, 126
          %v911 = vpop.permute.xlu0 %910
          %v912 = vsel %vm597, %v901, %v903
          %v913 = vsel %vm597, %v903, %v905
          %v914 = vsel %vm597, %v907, %v909
          %v915 = vsel %vm597, %v909, %v911
          %v920 = vunpack.c.l.b16 %v460
          %v921 = vunpack.c.l.b16 %v461
          %v922 = vunpack.c.l.b16 %v462
          %v923 = vunpack.c.l.b16 %v463
          %v924 = vpack.c.b16 %v921, %v920
          %v925 = vpack.c.b16 %v923, %v922
          %932 = vrot.lane.b32.xlu0 %v873, 96
          %v933 = vpop.permute.xlu0 %932
          %934 = vrot.lane.b32.xlu0 %v874, 96
          %v935 = vpop.permute.xlu0 %934
          %936 = vrot.lane.b32.xlu0 %v875, 96
          %v937 = vpop.permute.xlu0 %936
          %938 = vrot.lane.b32.xlu0 %v876, 96
          %v939 = vpop.permute.xlu0 %938
          %940 = vrot.lane.b32.xlu0 %v877, 96
          %v941 = vpop.permute.xlu0 %940
          %942 = vrot.lane.b32.xlu0 %v878, 96
          %v943 = vpop.permute.xlu0 %942
          %944 = vrot.lane.b32.xlu0 %v571, 96
          %v945 = vpop.permute.xlu0 %944
          %946 = vrot.lane.b32.xlu0 %v572, 96
          %v947 = vpop.permute.xlu0 %946
          %948 = vrot.lane.b32.xlu0 %v563, 96
          %v949 = vpop.permute.xlu0 %948
          %950 = vrot.lane.b32.xlu0 %v573, 96
          %v951 = vpop.permute.xlu0 %950
          %952 = vrot.lane.b32.xlu0 %v574, 96
          %v953 = vpop.permute.xlu0 %952
          %954 = vrot.lane.b32.xlu0 %v569, 96
          %v955 = vpop.permute.xlu0 %954
          %956 = vrot.lane.b32.xlu0 %v912, 96
          %v957 = vpop.permute.xlu0 %956
          %958 = vrot.lane.b32.xlu0 %v913, 96
          %v959 = vpop.permute.xlu0 %958
          %960 = vrot.lane.b32.xlu0 %v905, 96
          %v961 = vpop.permute.xlu0 %960
          %962 = vrot.lane.b32.xlu0 %v914, 96
          %v963 = vpop.permute.xlu0 %962
          %964 = vrot.lane.b32.xlu0 %v915, 96
          %v965 = vpop.permute.xlu0 %964
          %966 = vrot.lane.b32.xlu0 %v911, 96
          %v967 = vpop.permute.xlu0 %966
          %vm968 = vcmask 785408
          %v969 = vsel %vm968, %v933, %v935
          %v970 = vsel %vm968, %v935, %v937
          %v971 = vsel %vm968, %v939, %v941
          %v972 = vsel %vm968, %v941, %v943
          %v973 = vsel %vm968, %v945, %v947
          %v974 = vsel %vm968, %v947, %v949
          %v975 = vsel %vm968, %v951, %v953
          %v976 = vsel %vm968, %v953, %v955
          %v977 = vsel %vm968, %v957, %v959
          %v978 = vsel %vm968, %v959, %v961
          %v979 = vsel %vm968, %v963, %v965
          %v980 = vsel %vm968, %v965, %v967
          %v994 = vsel %vm735, %v924, 0
          %v997 = vsel %vm735, %v925, 0
          %999 = vmatprep.subr.bf16.mxu0 %v970
          %1000 = vmatpush1.bf16.msra.mxu0 %v969
          %1001 = vmatprep.subr.bf16.mxu0 %v972
          %1002 = vmatpush1.bf16.msra.mxu0 %v971
          %1003 = vmatprep.subr.bf16.mxu0 %v974
          %1004 = vmatpush1.bf16.msra.mxu0 %v973
          %1005 = vmatprep.subr.bf16.mxu0 %v976
          %1006 = vmatpush1.bf16.msra.mxu0 %v975
          %1007 = vmatprep.subr.bf16.mxu0 %v978
          %1008 = vmatpush1.bf16.msra.mxu0 %v977
          %1009 = vmatprep.subr.bf16.mxu0 %v980
          %1010 = vmatpush1.bf16.msra.mxu0 %v979
          %1011 = vmatprep.subr.bf16.mxu0 0
          %1012 = vmatpush1.bf16.msra.mxu0 0
          %1013 = vmatprep.subr.bf16.mxu0 0
          %1014 = vmatpush1.bf16.msra.mxu0 0
          %1015 = vmatprep.subr.bf16.mxu0 0
          %1016 = vmatpush1.bf16.msra.mxu0 0
          %1017 = vmatprep.subr.bf16.mxu0 0
          %1018 = vmatpush1.bf16.msra.mxu0 0
          %1019 = vmatprep.subr.bf16.mxu0 0
          %1020 = vmatpush1.bf16.msra.mxu0 0
          %1021 = vmatprep.subr.bf16.mxu0 0
          %1022 = vmatpush1.bf16.msra.mxu0 0
          %1023 = vmatprep.subr.bf16.mxu0 0
          %1024 = vmatpush1.bf16.msra.mxu0 0
          %1025 = vmatprep.subr.bf16.mxu0 0
          %1026 = vmatpush1.bf16.msra.mxu0 0
          %1027 = vmatprep.subr.bf16.mxu0 0
          %1028 = vmatpush1.bf16.msra.mxu0 0
          %1029 = vmatprep.subr.bf16.mxu0 0
          %1030 = vmatpush1.bf16.msra.mxu0 0
          %1031 = vmatprep.mubr.bf16.mxu0 0
          %1032 = vmatmul.mubr.bf16.gmra.mrb[0].mxu0 %v994
          %v1033 = vpop.f32.mrb[0].mxu0
          %v1034 = vadd.f32 0.0, %v1033
          %v1035 = vpop.f32.mrb[0].mxu0
          %v1036 = vadd.f32 0.0, %v1035
          %v1037 = vpop.f32.mrb[0].mxu0
          %v1038 = vadd.f32 0.0, %v1037
          %v1039 = vpop.f32.mrb[0].mxu0
          %v1040 = vadd.f32 0.0, %v1039
          %1041 = vmatprep.mubr.bf16.mxu0 0
          %1042 = vmatmul.mubr.bf16.gmra.mrb[0].mxu0 %v997
          %v1043 = vpop.f32.mrb[0].mxu0
          %v1044 = vadd.f32 0.0, %v1043
          %v1045 = vpop.f32.mrb[0].mxu0
          %v1046 = vadd.f32 0.0, %v1045
          %v1047 = vpop.f32.mrb[0].mxu0
          %v1048 = vadd.f32 0.0, %v1047
          %v1049 = vpop.f32.mrb[0].mxu0
          %v1050 = vadd.f32 0.0, %v1049
          %1051 = vdwg.mxu0
          %v1052 = vadd.f32 %v846, %v1034
          %v1053 = vadd.f32 %v848, %v1036
          %v1054 = vadd.f32 %v850, %v1038
          %v1055 = vadd.f32 %v852, %v1040
          %v1056 = vadd.f32 %v856, %v1044
          %v1057 = vadd.f32 %v858, %v1046
          %v1058 = vadd.f32 %v860, %v1048
          %v1059 = vadd.f32 %v862, %v1050
          %1061 = vset.pattern.permute.xlu0 0
          %1062 = vperm.xlu0 %1061, %v466
          %v1063 = vpop.permute.xlu0 %1062
          %1066 = vset.pattern.permute.xlu0 0
          %1067 = vperm.xlu0 %1066, %v467
          %v1068 = vpop.permute.xlu0 %1067
          %1071 = vset.pattern.permute.xlu0 0
          %1072 = vperm.xlu0 %1071, %v468
          %v1073 = vpop.permute.xlu0 %1072
          %1076 = vset.pattern.permute.xlu0 0
          %1077 = vperm.xlu0 %1076, %v469
          %v1078 = vpop.permute.xlu0 %1077
          %v1080 = vadd.f32 %v1052, %v1063
          %v1081 = vadd.f32 %v1053, %v1063
          %v1082 = vadd.f32 %v1054, %v1068
          %v1083 = vadd.f32 %v1055, %v1068
          %v1084 = vadd.f32 %v1056, %v1073
          %v1085 = vadd.f32 %v1057, %v1073
          %v1086 = vadd.f32 %v1058, %v1078
          %v1087 = vadd.f32 %v1059, %v1078
          %v1088 = vmax.f32 %v1080, 0.0
          %v1089 = vmax.f32 %v1081, 0.0
          %v1090 = vmax.f32 %v1082, 0.0
          %v1091 = vmax.f32 %v1083, 0.0
          %v1092 = vmax.f32 %v1084, 0.0
          %v1093 = vmax.f32 %v1085, 0.0
          %v1094 = vmax.f32 %v1086, 0.0
          %v1095 = vmax.f32 %v1087, 0.0
          %s1096 = smul.addr %s449, 4
          %s1097 = scalar_lea.vmem %s3, %s1096
          %v1098 = vld [vmem:[%s1097] sm:$0xf]
          %v1099 = vld [vmem:[%s1097 + $0x4] sm:$0xf]
          %v1100 = vld [vmem:[%s1097 + $0x8] sm:$0xf]
          %v1101 = vld [vmem:[%s1097 + $0xc] sm:$0xf]
          %v1102 = vld [vmem:[%s1097 + $0x10] sm:$0xf]
          %v1103 = vld [vmem:[%s1097 + $0x14] sm:$0xf]
          %v1104 = vld [vmem:[%s1097 + $0x18] sm:$0xf]
          %v1105 = vld [vmem:[%s1097 + $0x1c] sm:$0xf]
          %v1106 = vld [vmem:[%s1097 + $0x20] sm:$0xf]
          %v1107 = vld [vmem:[%s1097 + $0x24] sm:$0xf]
          %v1108 = vld [vmem:[%s1097 + $0x28] sm:$0xf]
          %v1109 = vld [vmem:[%s1097 + $0x2c] sm:$0xf]
          %s1110 = scalar_lea.vmem %s4, %s464
          %v1111 = vld [vmem:[%s1110] sm:$0xff]
          %v1112 = vld [vmem:[%s1110 + $0x8] sm:$0xff]
          %v1113 = vld [vmem:[%s1110 + $0x10] sm:$0xff]
          %v1114 = vld [vmem:[%s1110 + $0x18] sm:$0xff]
          %v1115 = vpack.c.bf16 %v1090, %v1088
          %v1116 = vpack.c.bf16 %v1091, %v1089
          %v1117 = vpack.c.bf16 %v1094, %v1092
          %v1118 = vpack.c.bf16 %v1095, %v1093
          %1123 = vrot.lane.b32.xlu0 %v1115, 17
          %v1124 = vpop.permute.xlu0 %1123
          %1125 = vrot.lane.b32.xlu0 %v1116, 17
          %v1126 = vpop.permute.xlu0 %1125
          %1127 = vrot.lane.b32.xlu0 %v1117, 17
          %v1128 = vpop.permute.xlu0 %1127
          %1129 = vrot.lane.b32.xlu0 %v1118, 17
          %v1130 = vpop.permute.xlu0 %1129
          %v1131 = vsel %vm486, %v1124, %v1126
          %v1132 = vsel %vm486, %v1128, %v1130
          %v1136 = vsel %vm491, 0, %v1124
          %v1139 = vsel %vm491, 0, %v1128
          %v1142 = vsel %vm491, %v1126, 0
          %v1145 = vsel %vm491, %v1130, 0
          %v1147 = vsel %vm519, %v1136, 0
          %v1148 = vsel %vm520, %v1131, 0
          %v1149 = vsel %vm519, %v1139, 0
          %v1150 = vsel %vm520, %v1132, 0
          %v1151 = vsel %vm545, %v1136, 0
          %v1152 = vsel %vm546, %v1131, 0
          %v1153 = vsel %vm547, %v1142, 0
          %v1154 = vsel %vm545, %v1139, 0
          %v1155 = vsel %vm546, %v1132, 0
          %v1156 = vsel %vm547, %v1145, 0
          %1161 = vrot.lane.b32.xlu0 %v1136, 127
          %v1162 = vpop.permute.xlu0 %1161
          %1163 = vrot.lane.b32.xlu0 %v1131, 127
          %v1164 = vpop.permute.xlu0 %1163
          %1165 = vrot.lane.b32.xlu0 %v1142, 127
          %v1166 = vpop.permute.xlu0 %1165
          %1167 = vrot.lane.b32.xlu0 %v1139, 127
          %v1168 = vpop.permute.xlu0 %1167
          %1169 = vrot.lane.b32.xlu0 %v1132, 127
          %v1170 = vpop.permute.xlu0 %1169
          %1171 = vrot.lane.b32.xlu0 %v1145, 127
          %v1172 = vpop.permute.xlu0 %1171
          %v1173 = vsel %vm570, %v1162, %v1164
          %v1174 = vsel %vm570, %v1164, %v1166
          %v1175 = vsel %vm570, %v1168, %v1170
          %v1176 = vsel %vm570, %v1170, %v1172
          %1187 = vrot.lane.b32.xlu0 %v1151, 126
          %v1188 = vpop.permute.xlu0 %1187
          %1189 = vrot.lane.b32.xlu0 %v1152, 126
          %v1190 = vpop.permute.xlu0 %1189
          %1191 = vrot.lane.b32.xlu0 %v1153, 126
          %v1192 = vpop.permute.xlu0 %1191
          %1193 = vrot.lane.b32.xlu0 %v1154, 126
          %v1194 = vpop.permute.xlu0 %1193
          %1195 = vrot.lane.b32.xlu0 %v1155, 126
          %v1196 = vpop.permute.xlu0 %1195
          %1197 = vrot.lane.b32.xlu0 %v1156, 126
          %v1198 = vpop.permute.xlu0 %1197
          %v1199 = vsel %vm597, %v1188, %v1190
          %v1200 = vsel %vm597, %v1190, %v1192
          %v1201 = vsel %vm597, %v1194, %v1196
          %v1202 = vsel %vm597, %v1196, %v1198
          %v1207 = vsel %vm612, %v1136, 0
          %v1208 = vsel %vm613, %v1131, 0
          %v1209 = vsel %vm614, %v1142, 0
          %v1210 = vsel %vm612, %v1139, 0
          %v1211 = vsel %vm613, %v1132, 0
          %v1212 = vsel %vm614, %v1145, 0
          %v1213 = vsel %vm627, %v1136, 0
          %v1214 = vsel %vm628, %v1131, 0
          %v1215 = vsel %vm629, %v1142, 0
          %v1216 = vsel %vm627, %v1139, 0
          %v1217 = vsel %vm628, %v1132, 0
          %v1218 = vsel %vm629, %v1145, 0
          %1225 = vrot.lane.b32.xlu0 %v1213, 126
          %v1226 = vpop.permute.xlu0 %1225
          %1227 = vrot.lane.b32.xlu0 %v1214, 126
          %v1228 = vpop.permute.xlu0 %1227
          %1229 = vrot.lane.b32.xlu0 %v1215, 126
          %v1230 = vpop.permute.xlu0 %1229
          %1231 = vrot.lane.b32.xlu0 %v1216, 126
          %v1232 = vpop.permute.xlu0 %1231
          %1233 = vrot.lane.b32.xlu0 %v1217, 126
          %v1234 = vpop.permute.xlu0 %1233
          %1235 = vrot.lane.b32.xlu0 %v1218, 126
          %v1236 = vpop.permute.xlu0 %1235
          %v1237 = vsel %vm597, %v1226, %v1228
          %v1238 = vsel %vm597, %v1228, %v1230
          %v1239 = vsel %vm597, %v1232, %v1234
          %v1240 = vsel %vm597, %v1234, %v1236
          %v1245 = vunpack.c.l.b16 %v1102
          %v1246 = vunpack.c.l.b16 %v1103
          %v1247 = vunpack.c.l.b16 %v1104
          %v1248 = vunpack.c.l.b16 %v1105
          %v1249 = vpack.c.b16 %v1246, %v1245
          %v1250 = vpack.c.b16 %v1248, %v1247
          %1257 = vrot.lane.b32.xlu0 %v1207, 112
          %v1258 = vpop.permute.xlu0 %1257
          %1259 = vrot.lane.b32.xlu0 %v1208, 112
          %v1260 = vpop.permute.xlu0 %1259
          %1261 = vrot.lane.b32.xlu0 %v1209, 112
          %v1262 = vpop.permute.xlu0 %1261
          %1263 = vrot.lane.b32.xlu0 %v1210, 112
          %v1264 = vpop.permute.xlu0 %1263
          %1265 = vrot.lane.b32.xlu0 %v1211, 112
          %v1266 = vpop.permute.xlu0 %1265
          %1267 = vrot.lane.b32.xlu0 %v1212, 112
          %v1268 = vpop.permute.xlu0 %1267
          %1269 = vrot.lane.b32.xlu0 %v1173, 112
          %v1270 = vpop.permute.xlu0 %1269
          %1271 = vrot.lane.b32.xlu0 %v1174, 112
          %v1272 = vpop.permute.xlu0 %1271
          %1273 = vrot.lane.b32.xlu0 %v1166, 112
          %v1274 = vpop.permute.xlu0 %1273
          %1275 = vrot.lane.b32.xlu0 %v1175, 112
          %v1276 = vpop.permute.xlu0 %1275
          %1277 = vrot.lane.b32.xlu0 %v1176, 112
          %v1278 = vpop.permute.xlu0 %1277
          %1279 = vrot.lane.b32.xlu0 %v1172, 112
          %v1280 = vpop.permute.xlu0 %1279
          %1281 = vrot.lane.b32.xlu0 %v1237, 112
          %v1282 = vpop.permute.xlu0 %1281
          %1283 = vrot.lane.b32.xlu0 %v1238, 112
          %v1284 = vpop.permute.xlu0 %1283
          %1285 = vrot.lane.b32.xlu0 %v1230, 112
          %v1286 = vpop.permute.xlu0 %1285
          %1287 = vrot.lane.b32.xlu0 %v1239, 112
          %v1288 = vpop.permute.xlu0 %1287
          %1289 = vrot.lane.b32.xlu0 %v1240, 112
          %v1290 = vpop.permute.xlu0 %1289
          %1291 = vrot.lane.b32.xlu0 %v1236, 112
          %v1292 = vpop.permute.xlu0 %1291
          %v1293 = vsel %vm710, %v1258, %v1260
          %v1294 = vsel %vm710, %v1260, %v1262
          %v1295 = vsel %vm710, %v1264, %v1266
          %v1296 = vsel %vm710, %v1266, %v1268
          %v1297 = vsel %vm710, %v1270, %v1272
          %v1298 = vsel %vm710, %v1272, %v1274
          %v1299 = vsel %vm710, %v1276, %v1278
          %v1300 = vsel %vm710, %v1278, %v1280
          %v1301 = vsel %vm710, %v1282, %v1284
          %v1302 = vsel %vm710, %v1284, %v1286
          %v1303 = vsel %vm710, %v1288, %v1290
          %v1304 = vsel %vm710, %v1290, %v1292
          %v1318 = vsel %vm735, %v1249, 0
          %v1321 = vsel %vm735, %v1250, 0
          %1323 = vmatprep.subr.bf16.mxu0 %v1294
          %1324 = vmatpush1.bf16.msra.mxu0 %v1293
          %1325 = vmatprep.subr.bf16.mxu0 %v1296
          %1326 = vmatpush1.bf16.msra.mxu0 %v1295
          %1327 = vmatprep.subr.bf16.mxu0 %v1298
          %1328 = vmatpush1.bf16.msra.mxu0 %v1297
          %1329 = vmatprep.subr.bf16.mxu0 %v1300
          %1330 = vmatpush1.bf16.msra.mxu0 %v1299
          %1331 = vmatprep.subr.bf16.mxu0 %v1302
          %1332 = vmatpush1.bf16.msra.mxu0 %v1301
          %1333 = vmatprep.subr.bf16.mxu0 %v1304
          %1334 = vmatpush1.bf16.msra.mxu0 %v1303
          %1335 = vmatprep.subr.bf16.mxu0 0
          %1336 = vmatpush1.bf16.msra.mxu0 0
          %1337 = vmatprep.subr.bf16.mxu0 0
          %1338 = vmatpush1.bf16.msra.mxu0 0
          %1339 = vmatprep.subr.bf16.mxu0 0
          %1340 = vmatpush1.bf16.msra.mxu0 0
          %1341 = vmatprep.subr.bf16.mxu0 0
          %1342 = vmatpush1.bf16.msra.mxu0 0
          %1343 = vmatprep.subr.bf16.mxu0 0
          %1344 = vmatpush1.bf16.msra.mxu0 0
          %1345 = vmatprep.subr.bf16.mxu0 0
          %1346 = vmatpush1.bf16.msra.mxu0 0
          %1347 = vmatprep.subr.bf16.mxu0 0
          %1348 = vmatpush1.bf16.msra.mxu0 0
          %1349 = vmatprep.subr.bf16.mxu0 0
          %1350 = vmatpush1.bf16.msra.mxu0 0
          %1351 = vmatprep.subr.bf16.mxu0 0
          %1352 = vmatpush1.bf16.msra.mxu0 0
          %1353 = vmatprep.subr.bf16.mxu0 0
          %1354 = vmatpush1.bf16.msra.mxu0 0
          %1355 = vmatprep.mubr.bf16.mxu0 0
          %1356 = vmatmul.mubr.bf16.gmra.mrb[0].mxu0 %v1318
          %v1357 = vpop.f32.mrb[0].mxu0
          %v1358 = vadd.f32 0.0, %v1357
          %v1359 = vpop.f32.mrb[0].mxu0
          %v1360 = vadd.f32 0.0, %v1359
          %v1361 = vpop.f32.mrb[0].mxu0
          %v1362 = vadd.f32 0.0, %v1361
          %v1363 = vpop.f32.mrb[0].mxu0
          %v1364 = vadd.f32 0.0, %v1363
          %1365 = vmatprep.mubr.bf16.mxu0 0
          %1366 = vmatmul.mubr.bf16.gmra.mrb[0].mxu0 %v1321
          %v1367 = vpop.f32.mrb[0].mxu0
          %v1368 = vadd.f32 0.0, %v1367
          %v1369 = vpop.f32.mrb[0].mxu0
          %v1370 = vadd.f32 0.0, %v1369
          %v1371 = vpop.f32.mrb[0].mxu0
          %v1372 = vadd.f32 0.0, %v1371
          %v1373 = vpop.f32.mrb[0].mxu0
          %v1374 = vadd.f32 0.0, %v1373
          %1375 = vdwg.mxu0
          %v1380 = vunpack.c.l.b16 %v1098
          %v1381 = vunpack.c.l.b16 %v1099
          %v1382 = vunpack.c.l.b16 %v1100
          %v1383 = vunpack.c.l.b16 %v1101
          %v1384 = vpack.c.b16 %v1381, %v1380
          %v1385 = vpack.c.b16 %v1383, %v1382
          %v1387 = vsel %vm735, %v1384, 0
          %v1390 = vsel %vm735, %v1385, 0
          %1392 = vmatprep.subr.bf16.mxu0 %v1148
          %1393 = vmatpush1.bf16.msra.mxu0 %v1147
          %1394 = vmatprep.subr.bf16.mxu0 %v1150
          %1395 = vmatpush1.bf16.msra.mxu0 %v1149
          %1396 = vmatprep.subr.bf16.mxu0 %v1174
          %1397 = vmatpush1.bf16.msra.mxu0 %v1173
          %1398 = vmatprep.subr.bf16.mxu0 %v1176
          %1399 = vmatpush1.bf16.msra.mxu0 %v1175
          %1400 = vmatprep.subr.bf16.mxu0 %v1200
          %1401 = vmatpush1.bf16.msra.mxu0 %v1199
          %1402 = vmatprep.subr.bf16.mxu0 %v1202
          %1403 = vmatpush1.bf16.msra.mxu0 %v1201
          %1404 = vmatprep.subr.bf16.mxu0 0
          %1405 = vmatpush1.bf16.msra.mxu0 0
          %1406 = vmatprep.subr.bf16.mxu0 0
          %1407 = vmatpush1.bf16.msra.mxu0 0
          %1408 = vmatprep.subr.bf16.mxu0 0
          %1409 = vmatpush1.bf16.msra.mxu0 0
          %1410 = vmatprep.subr.bf16.mxu0 0
          %1411 = vmatpush1.bf16.msra.mxu0 0
          %1412 = vmatprep.subr.bf16.mxu0 0
          %1413 = vmatpush1.bf16.msra.mxu0 0
          %1414 = vmatprep.subr.bf16.mxu0 0
          %1415 = vmatpush1.bf16.msra.mxu0 0
          %1416 = vmatprep.subr.bf16.mxu0 0
          %1417 = vmatpush1.bf16.msra.mxu0 0
          %1418 = vmatprep.subr.bf16.mxu0 0
          %1419 = vmatpush1.bf16.msra.mxu0 0
          %1420 = vmatprep.subr.bf16.mxu0 0
          %1421 = vmatpush1.bf16.msra.mxu0 0
          %1422 = vmatprep.subr.bf16.mxu0 0
          %1423 = vmatpush1.bf16.msra.mxu0 0
          %1424 = vmatprep.mubr.bf16.mxu0 0
          %1425 = vmatmul.mubr.bf16.gmra.mrb[0].mxu0 %v1387
          %v1426 = vpop.f32.mrb[0].mxu0
          %v1427 = vadd.f32 %v1358, %v1426
          %v1428 = vpop.f32.mrb[0].mxu0
          %v1429 = vadd.f32 %v1360, %v1428
          %v1430 = vpop.f32.mrb[0].mxu0
          %v1431 = vadd.f32 %v1362, %v1430
          %v1432 = vpop.f32.mrb[0].mxu0
          %v1433 = vadd.f32 %v1364, %v1432
          %1434 = vmatprep.mubr.bf16.mxu0 0
          %1435 = vmatmul.mubr.bf16.gmra.mrb[0].mxu0 %v1390
          %v1436 = vpop.f32.mrb[0].mxu0
          %v1437 = vadd.f32 %v1368, %v1436
          %v1438 = vpop.f32.mrb[0].mxu0
          %v1439 = vadd.f32 %v1370, %v1438
          %v1440 = vpop.f32.mrb[0].mxu0
          %v1441 = vadd.f32 %v1372, %v1440
          %v1442 = vpop.f32.mrb[0].mxu0
          %v1443 = vadd.f32 %v1374, %v1442
          %1444 = vdwg.mxu0
          %v1445 = vsel %vm870, %v1136, 0
          %v1446 = vsel %vm871, %v1131, 0
          %v1447 = vsel %vm872, %v1142, 0
          %v1448 = vsel %vm870, %v1139, 0
          %v1449 = vsel %vm871, %v1132, 0
          %v1450 = vsel %vm872, %v1145, 0
          %v1451 = vsel %vm885, %v1136, 0
          %v1452 = vsel %vm886, %v1131, 0
          %v1453 = vsel %vm887, %v1142, 0
          %v1454 = vsel %vm885, %v1139, 0
          %v1455 = vsel %vm886, %v1132, 0
          %v1456 = vsel %vm887, %v1145, 0
          %1463 = vrot.lane.b32.xlu0 %v1451, 126
          %v1464 = vpop.permute.xlu0 %1463
          %1465 = vrot.lane.b32.xlu0 %v1452, 126
          %v1466 = vpop.permute.xlu0 %1465
          %1467 = vrot.lane.b32.xlu0 %v1453, 126
          %v1468 = vpop.permute.xlu0 %1467
          %1469 = vrot.lane.b32.xlu0 %v1454, 126
          %v1470 = vpop.permute.xlu0 %1469
          %1471 = vrot.lane.b32.xlu0 %v1455, 126
          %v1472 = vpop.permute.xlu0 %1471
          %1473 = vrot.lane.b32.xlu0 %v1456, 126
          %v1474 = vpop.permute.xlu0 %1473
          %v1475 = vsel %vm597, %v1464, %v1466
          %v1476 = vsel %vm597, %v1466, %v1468
          %v1477 = vsel %vm597, %v1470, %v1472
          %v1478 = vsel %vm597, %v1472, %v1474
          %v1483 = vunpack.c.l.b16 %v1106
          %v1484 = vunpack.c.l.b16 %v1107
          %v1485 = vunpack.c.l.b16 %v1108
          %v1486 = vunpack.c.l.b16 %v1109
          %v1487 = vpack.c.b16 %v1484, %v1483
          %v1488 = vpack.c.b16 %v1486, %v1485
          %1495 = vrot.lane.b32.xlu0 %v1445, 96
          %v1496 = vpop.permute.xlu0 %1495
          %1497 = vrot.lane.b32.xlu0 %v1446, 96
          %v1498 = vpop.permute.xlu0 %1497
          %1499 = vrot.lane.b32.xlu0 %v1447, 96
          %v1500 = vpop.permute.xlu0 %1499
          %1501 = vrot.lane.b32.xlu0 %v1448, 96
          %v1502 = vpop.permute.xlu0 %1501
          %1503 = vrot.lane.b32.xlu0 %v1449, 96
          %v1504 = vpop.permute.xlu0 %1503
          %1505 = vrot.lane.b32.xlu0 %v1450, 96
          %v1506 = vpop.permute.xlu0 %1505
          %1507 = vrot.lane.b32.xlu0 %v1173, 96
          %v1508 = vpop.permute.xlu0 %1507
          %1509 = vrot.lane.b32.xlu0 %v1174, 96
          %v1510 = vpop.permute.xlu0 %1509
          %1511 = vrot.lane.b32.xlu0 %v1166, 96
          %v1512 = vpop.permute.xlu0 %1511
          %1513 = vrot.lane.b32.xlu0 %v1175, 96
          %v1514 = vpop.permute.xlu0 %1513
          %1515 = vrot.lane.b32.xlu0 %v1176, 96
          %v1516 = vpop.permute.xlu0 %1515
          %1517 = vrot.lane.b32.xlu0 %v1172, 96
          %v1518 = vpop.permute.xlu0 %1517
          %1519 = vrot.lane.b32.xlu0 %v1475, 96
          %v1520 = vpop.permute.xlu0 %1519
          %1521 = vrot.lane.b32.xlu0 %v1476, 96
          %v1522 = vpop.permute.xlu0 %1521
          %1523 = vrot.lane.b32.xlu0 %v1468, 96
          %v1524 = vpop.permute.xlu0 %1523
          %1525 = vrot.lane.b32.xlu0 %v1477, 96
          %v1526 = vpop.permute.xlu0 %1525
          %1527 = vrot.lane.b32.xlu0 %v1478, 96
          %v1528 = vpop.permute.xlu0 %1527
          %1529 = vrot.lane.b32.xlu0 %v1474, 96
          %v1530 = vpop.permute.xlu0 %1529
          %v1531 = vsel %vm968, %v1496, %v1498
          %v1532 = vsel %vm968, %v1498, %v1500
          %v1533 = vsel %vm968, %v1502, %v1504
          %v1534 = vsel %vm968, %v1504, %v1506
          %v1535 = vsel %vm968, %v1508, %v1510
          %v1536 = vsel %vm968, %v1510, %v1512
          %v1537 = vsel %vm968, %v1514, %v1516
          %v1538 = vsel %vm968, %v1516, %v1518
          %v1539 = vsel %vm968, %v1520, %v1522
          %v1540 = vsel %vm968, %v1522, %v1524
          %v1541 = vsel %vm968, %v1526, %v1528
          %v1542 = vsel %vm968, %v1528, %v1530
          %v1556 = vsel %vm735, %v1487, 0
          %v1559 = vsel %vm735, %v1488, 0
          %1561 = vmatprep.subr.bf16.mxu0 %v1532
          %1562 = vmatpush1.bf16.msra.mxu0 %v1531
          %1563 = vmatprep.subr.bf16.mxu0 %v1534
          %1564 = vmatpush1.bf16.msra.mxu0 %v1533
          %1565 = vmatprep.subr.bf16.mxu0 %v1536
          %1566 = vmatpush1.bf16.msra.mxu0 %v1535
          %1567 = vmatprep.subr.bf16.mxu0 %v1538
          %1568 = vmatpush1.bf16.msra.mxu0 %v1537
          %1569 = vmatprep.subr.bf16.mxu0 %v1540
          %1570 = vmatpush1.bf16.msra.mxu0 %v1539
          %1571 = vmatprep.subr.bf16.mxu0 %v1542
          %1572 = vmatpush1.bf16.msra.mxu0 %v1541
          %1573 = vmatprep.subr.bf16.mxu0 0
          %1574 = vmatpush1.bf16.msra.mxu0 0
          %1575 = vmatprep.subr.bf16.mxu0 0
          %1576 = vmatpush1.bf16.msra.mxu0 0
          %1577 = vmatprep.subr.bf16.mxu0 0
          %1578 = vmatpush1.bf16.msra.mxu0 0
          %1579 = vmatprep.subr.bf16.mxu0 0
          %1580 = vmatpush1.bf16.msra.mxu0 0
          %1581 = vmatprep.subr.bf16.mxu0 0
          %1582 = vmatpush1.bf16.msra.mxu0 0
          %1583 = vmatprep.subr.bf16.mxu0 0
          %1584 = vmatpush1.bf16.msra.mxu0 0
          %1585 = vmatprep.subr.bf16.mxu0 0
          %1586 = vmatpush1.bf16.msra.mxu0 0
          %1587 = vmatprep.subr.bf16.mxu0 0
          %1588 = vmatpush1.bf16.msra.mxu0 0
          %1589 = vmatprep.subr.bf16.mxu0 0
          %1590 = vmatpush1.bf16.msra.mxu0 0
          %1591 = vmatprep.subr.bf16.mxu0 0
          %1592 = vmatpush1.bf16.msra.mxu0 0
          %1593 = vmatprep.mubr.bf16.mxu0 0
          %1594 = vmatmul.mubr.bf16.gmra.mrb[0].mxu0 %v1556
          %v1595 = vpop.f32.mrb[0].mxu0
          %v1596 = vadd.f32 0.0, %v1595
          %v1597 = vpop.f32.mrb[0].mxu0
          %v1598 = vadd.f32 0.0, %v1597
          %v1599 = vpop.f32.mrb[0].mxu0
          %v1600 = vadd.f32 0.0, %v1599
          %v1601 = vpop.f32.mrb[0].mxu0
          %v1602 = vadd.f32 0.0, %v1601
          %1603 = vmatprep.mubr.bf16.mxu0 0
          %1604 = vmatmul.mubr.bf16.gmra.mrb[0].mxu0 %v1559
          %v1605 = vpop.f32.mrb[0].mxu0
          %v1606 = vadd.f32 0.0, %v1605
          %v1607 = vpop.f32.mrb[0].mxu0
          %v1608 = vadd.f32 0.0, %v1607
          %v1609 = vpop.f32.mrb[0].mxu0
          %v1610 = vadd.f32 0.0, %v1609
          %v1611 = vpop.f32.mrb[0].mxu0
          %v1612 = vadd.f32 0.0, %v1611
          %1613 = vdwg.mxu0
          %v1614 = vadd.f32 %v1427, %v1596
          %v1615 = vadd.f32 %v1429, %v1598
          %v1616 = vadd.f32 %v1431, %v1600
          %v1617 = vadd.f32 %v1433, %v1602
          %v1618 = vadd.f32 %v1437, %v1606
          %v1619 = vadd.f32 %v1439, %v1608
          %v1620 = vadd.f32 %v1441, %v1610
          %v1621 = vadd.f32 %v1443, %v1612
          %1623 = vset.pattern.permute.xlu0 0
          %1624 = vperm.xlu0 %1623, %v1111
          %v1625 = vpop.permute.xlu0 %1624
          %1628 = vset.pattern.permute.xlu0 0
          %1629 = vperm.xlu0 %1628, %v1112
          %v1630 = vpop.permute.xlu0 %1629
          %1633 = vset.pattern.permute.xlu0 0
          %1634 = vperm.xlu0 %1633, %v1113
          %v1635 = vpop.permute.xlu0 %1634
          %1638 = vset.pattern.permute.xlu0 0
          %1639 = vperm.xlu0 %1638, %v1114
          %v1640 = vpop.permute.xlu0 %1639
          %v1642 = vadd.f32 %v1614, %v1625
          %v1643 = vadd.f32 %v1615, %v1625
          %v1644 = vadd.f32 %v1616, %v1630
          %v1645 = vadd.f32 %v1617, %v1630
          %v1646 = vadd.f32 %v1618, %v1635
          %v1647 = vadd.f32 %v1619, %v1635
          %v1648 = vadd.f32 %v1620, %v1640
          %v1649 = vadd.f32 %v1621, %v1640
          %v1650 = vadd.f32 %v1642, %v1643
          %1651 = vadd.xlane.f32.xlu0 %v1650
          %v1652 = vpop.xlane.xlu0 %1651
          %v1653 = vadd.f32 %v1644, %v1645
          %1654 = vadd.xlane.f32.xlu0 %v1653
          %v1655 = vpop.xlane.xlu0 %1654
          %v1656 = vadd.f32 %v1646, %v1647
          %1657 = vadd.xlane.f32.xlu0 %v1656
          %v1658 = vpop.xlane.xlu0 %1657
          %v1659 = vadd.f32 %v1648, %v1649
          %1660 = vadd.xlane.f32.xlu0 %v1659
          %v1661 = vpop.xlane.xlu0 %1660
          %v1662 = vmul.f32 %v1652, 0.00390625
          %v1663 = vmul.f32 %v1655, 0.00390625
          %v1664 = vmul.f32 %v1658, 0.00390625
          %v1665 = vmul.f32 %v1661, 0.00390625
          %s1666 = scalar_lea.vmem %s5, %s464
          %v1667 = vld [vmem:[%s1666] sm:$0xff]
          %v1668 = vld [vmem:[%s1666 + $0x8] sm:$0xff]
          %v1669 = vld [vmem:[%s1666 + $0x10] sm:$0xff]
          %v1670 = vld [vmem:[%s1666 + $0x18] sm:$0xff]
          %v1671 = vmul.f32 %v1662, %v1667
          %v1672 = vmul.f32 %v1663, %v1668
          %v1673 = vmul.f32 %v1664, %v1669
          %v1674 = vmul.f32 %v1665, %v1670
          %vm1675 = vcmask 31744
          %v1676 = vsel %vm1675, %v1671, 0.0
          %v1677 = vsel %vm1675, %v1672, 0.0
          %v1678 = vadd.f32 %v1676, %v1677
          %v1679 = vsel %vm1675, %v1673, 0.0
          %v1680 = vadd.f32 %v1678, %v1679
          %v1681 = vsel %vm1675, %v1674, 0.0
          %v1682 = vadd.f32 %v1680, %v1681
          %v1683 = vrot.slane %v1682, 4
          %v1684 = vadd.f32 %v1682, %v1683
          %v1685 = vrot.slane %v1684, 2
          %v1686 = vadd.f32 %v1684, %v1685
          %v1687 = vrot.slane %v1686, 1
          %v1688 = vadd.f32 %v1686, %v1687
          %s1689 = scalar_lea.vmem %s6, %s436
          %v1690 = vld [vmem:[%s1689] sm:$0x1]
          %v1691 = vadd.f32 %v1688, %v1690
          %v1692 = vmax.f32 %v1691, 0.0
          %s1693 = scalar_lea.vmem %s7, %s464
          %v1694 = vld [vmem:[%s1693] sm:$0xff]
          %v1695 = vld [vmem:[%s1693 + $0x8] sm:$0xff]
          %v1696 = vld [vmem:[%s1693 + $0x10] sm:$0xff]
          %v1697 = vld [vmem:[%s1693 + $0x18] sm:$0xff]
          %v1698 = vlaneseq
          %v1699 = vshrl.u32 %v1698, 7
          %v1700 = vsub.s32 0, %v1699
          %v1701 = vrot.slane %v1692, %v1700
          %v1702 = vmul.f32 %v1701, %v1694
          %v1703 = vmul.f32 %v1701, %v1695
          %v1704 = vmul.f32 %v1701, %v1696
          %v1705 = vmul.f32 %v1701, %v1697
          %v1706 = vsel %vm1675, %v1702, 0.0
          %1707 = vadd.xlane.f32.xlu0 %v1706
          %v1708 = vpop.xlane.xlu0 %1707
          %v1709 = vsel %vm1675, %v1703, 0.0
          %1710 = vadd.xlane.f32.xlu0 %v1709
          %v1711 = vpop.xlane.xlu0 %1710
          %v1712 = vsel %vm1675, %v1704, 0.0
          %1713 = vadd.xlane.f32.xlu0 %v1712
          %v1714 = vpop.xlane.xlu0 %1713
          %v1715 = vsel %vm1675, %v1705, 0.0
          %1716 = vadd.xlane.f32.xlu0 %v1715
          %v1717 = vpop.xlane.xlu0 %1716
          %s1718 = scalar_lea.vmem %s8, %s464
          %v1719 = vld [vmem:[%s1718] sm:$0xff]
          %v1720 = vld [vmem:[%s1718 + $0x8] sm:$0xff]
          %v1721 = vld [vmem:[%s1718 + $0x10] sm:$0xff]
          %v1722 = vld [vmem:[%s1718 + $0x18] sm:$0xff]
          %v1723 = vadd.f32 %v1708, %v1719
          %v1724 = vadd.f32 %v1711, %v1720
          %v1725 = vadd.f32 %v1714, %v1721
          %v1726 = vadd.f32 %v1717, %v1722
          %v1727 = vxor.u32 %v1723, 2147483648
          %v1728 = vxor.u32 %v1724, 2147483648
          %v1729 = vxor.u32 %v1725, 2147483648
          %v1730 = vxor.u32 %v1726, 2147483648
          %v1731 = vmul.f32 %v1727, 1.442695
          %v1732 = vpow.pop %v1731
          %v1733 = vmul.f32 %v1728, 1.442695
          %v1734 = vpow.pop %v1733
          %v1735 = vmul.f32 %v1729, 1.442695
          %v1736 = vpow.pop %v1735
          %v1737 = vmul.f32 %v1730, 1.442695
          %v1738 = vpow.pop %v1737
          %v1739 = vadd.f32 %v1732, 1.0
          %v1740 = vadd.f32 %v1734, 1.0
          %v1741 = vadd.f32 %v1736, 1.0
          %v1742 = vadd.f32 %v1738, 1.0
          %v1743 = vrcp.pop %v1739
          %v1744 = vmul.f32 1.0, %v1743
          %v1745 = vrcp.pop %v1740
          %v1746 = vmul.f32 1.0, %v1745
          %v1747 = vrcp.pop %v1741
          %v1748 = vmul.f32 1.0, %v1747
          %v1749 = vrcp.pop %v1742
          %v1750 = vmul.f32 1.0, %v1749
          %1752 = vset.pattern.permute.xlu0 0
          %1753 = vperm.xlu0 %1752, %v1744
          %v1754 = vpop.permute.xlu0 %1753
          %1757 = vset.pattern.permute.xlu0 0
          %1758 = vperm.xlu0 %1757, %v1746
          %v1759 = vpop.permute.xlu0 %1758
          %1762 = vset.pattern.permute.xlu0 0
          %1763 = vperm.xlu0 %1762, %v1748
          %v1764 = vpop.permute.xlu0 %1763
          %1767 = vset.pattern.permute.xlu0 0
          %1768 = vperm.xlu0 %1767, %v1750
          %v1769 = vpop.permute.xlu0 %1768
          %v1771 = vmul.f32 %v1642, %v1754
          %v1772 = vmul.f32 %v1643, %v1754
          %v1773 = vmul.f32 %v1644, %v1759
          %v1774 = vmul.f32 %v1645, %v1759
          %v1775 = vmul.f32 %v1646, %v1764
          %v1776 = vmul.f32 %v1647, %v1764
          %v1777 = vmul.f32 %v1648, %v1769
          %v1778 = vmul.f32 %v1649, %v1769
          %v1779 = vadd.f32 %v1771, %v441
          %v1780 = vadd.f32 %v1772, %v442
          %v1781 = vadd.f32 %v1773, %v443
          %v1782 = vadd.f32 %v1774, %v444
          %v1783 = vadd.f32 %v1775, %v445
          %v1784 = vadd.f32 %v1776, %v446
          %v1785 = vadd.f32 %v1777, %v447
          %v1786 = vadd.f32 %v1778, %v448
          %1787 = vst [vmem:[#allocation2] sm:$0xff] %v1779
          %1788 = vst [vmem:[#allocation2 + $0x8] sm:$0xff] %v1780
          %1789 = vst [vmem:[#allocation2 + $0x10] sm:$0xff] %v1781
          %1790 = vst [vmem:[#allocation2 + $0x18] sm:$0xff] %v1782
          %1791 = vst [vmem:[#allocation2 + $0x20] sm:$0xff] %v1783
          %1792 = vst [vmem:[#allocation2 + $0x28] sm:$0xff] %v1784
          %1793 = vst [vmem:[#allocation2 + $0x30] sm:$0xff] %v1785
          %1794 = vst [vmem:[#allocation2 + $0x38] sm:$0xff] %v1786
        $region69: #{tpu_custom_call.1} parent=63 // loop_footer
          %s440 = sadd.s32 1, %s436
        $region70: #{tpu_custom_call.1} parent=63 // loop_footer_branch
          %435 = sbr.rel target = $region66
        $region71: #{tpu_custom_call.1} parent=63 // loop_exit
          _
        %v1795 = vld [vmem:[#allocation2] sm:$0xff]
        %v1796 = vld [vmem:[#allocation2 + $0x8] sm:$0xff]
        %v1797 = vld [vmem:[#allocation2 + $0x10] sm:$0xff]
        %v1798 = vld [vmem:[#allocation2 + $0x18] sm:$0xff]
        %v1799 = vld [vmem:[#allocation2 + $0x20] sm:$0xff]
        %v1800 = vld [vmem:[#allocation2 + $0x28] sm:$0xff]
        %v1801 = vld [vmem:[#allocation2 + $0x30] sm:$0xff]
        %v1802 = vld [vmem:[#allocation2 + $0x38] sm:$0xff]
        %v1803 = vld [vmem:[%s9] sm:$0xf]
        %v1804 = vld [vmem:[%s9 + $0x4] sm:$0xf]
        %v1805 = vld [vmem:[%s9 + $0x8] sm:$0xf]
        %v1806 = vld [vmem:[%s9 + $0xc] sm:$0xf]
        %v1807 = vld [vmem:[%s9 + $0x10] sm:$0xf]
        %v1808 = vld [vmem:[%s9 + $0x14] sm:$0xf]
        %v1809 = vld [vmem:[%s9 + $0x18] sm:$0xf]
        %v1810 = vld [vmem:[%s9 + $0x1c] sm:$0xf]
        %v1811 = vld [vmem:[%s9 + $0x20] sm:$0xf]
        %v1812 = vld [vmem:[%s9 + $0x24] sm:$0xf]
        %v1813 = vld [vmem:[%s9 + $0x28] sm:$0xf]
        %v1814 = vld [vmem:[%s9 + $0x2c] sm:$0xf]
        %v1815 = vld [vmem:[%s10] sm:$0xff]
        %v1816 = vld [vmem:[%s10 + $0x8] sm:$0xff]
        %v1817 = vld [vmem:[%s10 + $0x10] sm:$0xff]
        %v1818 = vld [vmem:[%s10 + $0x18] sm:$0xff]
        %v1819 = vpack.c.bf16 %v1797, %v1795
        %v1820 = vpack.c.bf16 %v1798, %v1796
        %v1821 = vpack.c.bf16 %v1801, %v1799
        %v1822 = vpack.c.bf16 %v1802, %v1800
        %1827 = vrot.lane.b32.xlu0 %v1819, 17
        %v1828 = vpop.permute.xlu0 %1827
        %1829 = vrot.lane.b32.xlu0 %v1820, 17
        %v1830 = vpop.permute.xlu0 %1829
        %1831 = vrot.lane.b32.xlu0 %v1821, 17
        %v1832 = vpop.permute.xlu0 %1831
        %1833 = vrot.lane.b32.xlu0 %v1822, 17
        %v1834 = vpop.permute.xlu0 %1833
        %vm1835 = vcmask 138240
        %v1836 = vsel %vm1835, %v1828, %v1830
        %v1837 = vsel %vm1835, %v1832, %v1834
        %vm1840 = vcmask 138240
        %v1843 = vsel %vm1840, 0, %v1828
        %v1846 = vsel %vm1840, 0, %v1832
        %v1849 = vsel %vm1840, %v1830, 0
        %v1852 = vsel %vm1840, %v1834, 0
        %v1854 = vsel %vm415, 1, 0
        %v1855 = vsel %vm416, 1, 0
        %vm1856 = vcmp.eq.s32.totalorder %v1854, 1
        %vm1857 = vcmp.eq.s32.totalorder %v1855, 1
        %vm1858 = vmpackc.low %vm1857, %vm1856
        %v1859 = vsel %vm1858, 65537, 0
        %v1860 = vlaneseq
        %v1861 = vshrl.u32 %v1860, 7
        %v1862 = vsub.s32 0, %v1861
        %v1863 = vrot.slane %v1859, %v1862
        %v1864 = vlaneseq
        %v1865 = vshrl.u32 %v1864, 7
        %v1866 = vsub.s32 4, %v1865
        %v1867 = vrot.slane %v1859, %v1866
        %vm1868 = vcmp.ne.s16.totalorder %v1863, 0
        %vm1869 = vcmp.ne.s16.totalorder %v1867, 0
        %v1870 = vsel %vm1868, %v1843, 0
        %v1871 = vsel %vm1869, %v1836, 0
        %v1872 = vsel %vm1868, %v1846, 0
        %v1873 = vsel %vm1869, %v1837, 0
        %v1874 = vsel %vm417, 1, 0
        %v1875 = vsel %vm418, 1, 0
        %vm1876 = vcmp.eq.s32.totalorder %v1874, 1
        %vm1877 = vcmp.eq.s32.totalorder %v1875, 1
        %vm1878 = vmpackc.low %vm1877, %vm1876
        %v1879 = vsel %vm1878, 65537, 0
        %v1880 = vlaneseq
        %v1881 = vshrl.u32 %v1880, 7
        %v1882 = vsub.s32 0, %v1881
        %v1883 = vrot.slane %v1879, %v1882
        %v1884 = vlaneseq
        %v1885 = vshrl.u32 %v1884, 7
        %v1886 = vsub.s32 4, %v1885
        %v1887 = vrot.slane %v1879, %v1886
        %1888 = vrot.lane.b32.xlu0 %v1883, 2
        %v1889 = vpop.permute.xlu0 %1888
        %1890 = vrot.lane.b32.xlu0 %v1887, 2
        %v1891 = vpop.permute.xlu0 %1890
        %vm1892 = vcmask 15360
        %v1893 = vsel %vm1892, %v1889, %v1891
        %vm1894 = vcmp.ne.s16.totalorder %v1889, 0
        %vm1895 = vcmp.ne.s16.totalorder %v1893, 0
        %vm1896 = vcmp.ne.s16.totalorder %v1891, 0
        %v1897 = vsel %vm1894, %v1843, 0
        %v1898 = vsel %vm1895, %v1836, 0
        %v1899 = vsel %vm1896, %v1849, 0
        %v1900 = vsel %vm1894, %v1846, 0
        %v1901 = vsel %vm1895, %v1837, 0
        %v1902 = vsel %vm1896, %v1852, 0
        %1907 = vrot.lane.b32.xlu0 %v1843, 127
        %v1908 = vpop.permute.xlu0 %1907
        %1909 = vrot.lane.b32.xlu0 %v1836, 127
        %v1910 = vpop.permute.xlu0 %1909
        %1911 = vrot.lane.b32.xlu0 %v1849, 127
        %v1912 = vpop.permute.xlu0 %1911
        %1913 = vrot.lane.b32.xlu0 %v1846, 127
        %v1914 = vpop.permute.xlu0 %1913
        %1915 = vrot.lane.b32.xlu0 %v1837, 127
        %v1916 = vpop.permute.xlu0 %1915
        %1917 = vrot.lane.b32.xlu0 %v1852, 127
        %v1918 = vpop.permute.xlu0 %1917
        %vm1919 = vcmask 1039360
        %v1920 = vsel %vm1919, %v1908, %v1910
        %v1921 = vsel %vm1919, %v1910, %v1912
        %v1922 = vsel %vm1919, %v1914, %v1916
        %v1923 = vsel %vm1919, %v1916, %v1918
        %1934 = vrot.lane.b32.xlu0 %v1897, 126
        %v1935 = vpop.permute.xlu0 %1934
        %1936 = vrot.lane.b32.xlu0 %v1898, 126
        %v1937 = vpop.permute.xlu0 %1936
        %1938 = vrot.lane.b32.xlu0 %v1899, 126
        %v1939 = vpop.permute.xlu0 %1938
        %1940 = vrot.lane.b32.xlu0 %v1900, 126
        %v1941 = vpop.permute.xlu0 %1940
        %1942 = vrot.lane.b32.xlu0 %v1901, 126
        %v1943 = vpop.permute.xlu0 %1942
        %1944 = vrot.lane.b32.xlu0 %v1902, 126
        %v1945 = vpop.permute.xlu0 %1944
        %vm1946 = vcmask 1031168
        %v1947 = vsel %vm1946, %v1935, %v1937
        %v1948 = vsel %vm1946, %v1937, %v1939
        %v1949 = vsel %vm1946, %v1941, %v1943
        %v1950 = vsel %vm1946, %v1943, %v1945
        %1955 = vrot.lane.b32.xlu0 %v1863, 16
        %v1956 = vpop.permute.xlu0 %1955
        %1957 = vrot.lane.b32.xlu0 %v1867, 16
        %v1958 = vpop.permute.xlu0 %1957
        %vm1959 = vcmask 130048
        %v1960 = vsel %vm1959, %v1956, %v1958
        %vm1961 = vcmp.ne.s16.totalorder %v1956, 0
        %vm1962 = vcmp.ne.s16.totalorder %v1960, 0
        %vm1963 = vcmp.ne.s16.totalorder %v1958, 0
        %v1964 = vsel %vm1961, %v1843, 0
        %v1965 = vsel %vm1962, %v1836, 0
        %v1966 = vsel %vm1963, %v1849, 0
        %v1967 = vsel %vm1961, %v1846, 0
        %v1968 = vsel %vm1962, %v1837, 0
        %v1969 = vsel %vm1963, %v1852, 0
        %1970 = vrot.lane.b32.xlu0 %v1883, 18
        %v1971 = vpop.permute.xlu0 %1970
        %1972 = vrot.lane.b32.xlu0 %v1887, 18
        %v1973 = vpop.permute.xlu0 %1972
        %vm1974 = vcmask 146432
        %v1975 = vsel %vm1974, %v1971, %v1973
        %vm1976 = vcmp.ne.s16.totalorder %v1971, 0
        %vm1977 = vcmp.ne.s16.totalorder %v1975, 0
        %vm1978 = vcmp.ne.s16.totalorder %v1973, 0
        %v1979 = vsel %vm1976, %v1843, 0
        %v1980 = vsel %vm1977, %v1836, 0
        %v1981 = vsel %vm1978, %v1849, 0
        %v1982 = vsel %vm1976, %v1846, 0
        %v1983 = vsel %vm1977, %v1837, 0
        %v1984 = vsel %vm1978, %v1852, 0
        %1991 = vrot.lane.b32.xlu0 %v1979, 126
        %v1992 = vpop.permute.xlu0 %1991
        %1993 = vrot.lane.b32.xlu0 %v1980, 126
        %v1994 = vpop.permute.xlu0 %1993
        %1995 = vrot.lane.b32.xlu0 %v1981, 126
        %v1996 = vpop.permute.xlu0 %1995
        %1997 = vrot.lane.b32.xlu0 %v1982, 126
        %v1998 = vpop.permute.xlu0 %1997
        %1999 = vrot.lane.b32.xlu0 %v1983, 126
        %v2000 = vpop.permute.xlu0 %1999
        %2001 = vrot.lane.b32.xlu0 %v1984, 126
        %v2002 = vpop.permute.xlu0 %2001
        %v2003 = vsel %vm1946, %v1992, %v1994
        %v2004 = vsel %vm1946, %v1994, %v1996
        %v2005 = vsel %vm1946, %v1998, %v2000
        %v2006 = vsel %vm1946, %v2000, %v2002
        %v2011 = vunpack.c.l.b16 %v1807
        %v2012 = vunpack.c.l.b16 %v1808
        %v2013 = vunpack.c.l.b16 %v1809
        %v2014 = vunpack.c.l.b16 %v1810
        %v2015 = vpack.c.b16 %v2012, %v2011
        %v2016 = vpack.c.b16 %v2014, %v2013
        %2023 = vrot.lane.b32.xlu0 %v1964, 112
        %v2024 = vpop.permute.xlu0 %2023
        %2025 = vrot.lane.b32.xlu0 %v1965, 112
        %v2026 = vpop.permute.xlu0 %2025
        %2027 = vrot.lane.b32.xlu0 %v1966, 112
        %v2028 = vpop.permute.xlu0 %2027
        %2029 = vrot.lane.b32.xlu0 %v1967, 112
        %v2030 = vpop.permute.xlu0 %2029
        %2031 = vrot.lane.b32.xlu0 %v1968, 112
        %v2032 = vpop.permute.xlu0 %2031
        %2033 = vrot.lane.b32.xlu0 %v1969, 112
        %v2034 = vpop.permute.xlu0 %2033
        %2035 = vrot.lane.b32.xlu0 %v1920, 112
        %v2036 = vpop.permute.xlu0 %2035
        %2037 = vrot.lane.b32.xlu0 %v1921, 112
        %v2038 = vpop.permute.xlu0 %2037
        %2039 = vrot.lane.b32.xlu0 %v1912, 112
        %v2040 = vpop.permute.xlu0 %2039
        %2041 = vrot.lane.b32.xlu0 %v1922, 112
        %v2042 = vpop.permute.xlu0 %2041
        %2043 = vrot.lane.b32.xlu0 %v1923, 112
        %v2044 = vpop.permute.xlu0 %2043
        %2045 = vrot.lane.b32.xlu0 %v1918, 112
        %v2046 = vpop.permute.xlu0 %2045
        %2047 = vrot.lane.b32.xlu0 %v2003, 112
        %v2048 = vpop.permute.xlu0 %2047
        %2049 = vrot.lane.b32.xlu0 %v2004, 112
        %v2050 = vpop.permute.xlu0 %2049
        %2051 = vrot.lane.b32.xlu0 %v1996, 112
        %v2052 = vpop.permute.xlu0 %2051
        %2053 = vrot.lane.b32.xlu0 %v2005, 112
        %v2054 = vpop.permute.xlu0 %2053
        %2055 = vrot.lane.b32.xlu0 %v2006, 112
        %v2056 = vpop.permute.xlu0 %2055
        %2057 = vrot.lane.b32.xlu0 %v2002, 112
        %v2058 = vpop.permute.xlu0 %2057
        %vm2059 = vcmask 916480
        %v2060 = vsel %vm2059, %v2024, %v2026
        %v2061 = vsel %vm2059, %v2026, %v2028
        %v2062 = vsel %vm2059, %v2030, %v2032
        %v2063 = vsel %vm2059, %v2032, %v2034
        %v2064 = vsel %vm2059, %v2036, %v2038
        %v2065 = vsel %vm2059, %v2038, %v2040
        %v2066 = vsel %vm2059, %v2042, %v2044
        %v2067 = vsel %vm2059, %v2044, %v2046
        %v2068 = vsel %vm2059, %v2048, %v2050
        %v2069 = vsel %vm2059, %v2050, %v2052
        %v2070 = vsel %vm2059, %v2054, %v2056
        %v2071 = vsel %vm2059, %v2056, %v2058
        %vm2084 = vcmask 785408
        %v2086 = vsel %vm2084, %v2015, 0
        %v2089 = vsel %vm2084, %v2016, 0
        %2091 = vmatprep.subr.bf16.mxu0 %v2061
        %2092 = vmatpush1.bf16.msra.mxu0 %v2060
        %2093 = vmatprep.subr.bf16.mxu0 %v2063
        %2094 = vmatpush1.bf16.msra.mxu0 %v2062
        %2095 = vmatprep.subr.bf16.mxu0 %v2065
        %2096 = vmatpush1.bf16.msra.mxu0 %v2064
        %2097 = vmatprep.subr.bf16.mxu0 %v2067
        %2098 = vmatpush1.bf16.msra.mxu0 %v2066
        %2099 = vmatprep.subr.bf16.mxu0 %v2069
        %2100 = vmatpush1.bf16.msra.mxu0 %v2068
        %2101 = vmatprep.subr.bf16.mxu0 %v2071
        %2102 = vmatpush1.bf16.msra.mxu0 %v2070
        %2103 = vmatprep.subr.bf16.mxu0 0
        %2104 = vmatpush1.bf16.msra.mxu0 0
        %2105 = vmatprep.subr.bf16.mxu0 0
        %2106 = vmatpush1.bf16.msra.mxu0 0
        %2107 = vmatprep.subr.bf16.mxu0 0
        %2108 = vmatpush1.bf16.msra.mxu0 0
        %2109 = vmatprep.subr.bf16.mxu0 0
        %2110 = vmatpush1.bf16.msra.mxu0 0
        %2111 = vmatprep.subr.bf16.mxu0 0
        %2112 = vmatpush1.bf16.msra.mxu0 0
        %2113 = vmatprep.subr.bf16.mxu0 0
        %2114 = vmatpush1.bf16.msra.mxu0 0
        %2115 = vmatprep.subr.bf16.mxu0 0
        %2116 = vmatpush1.bf16.msra.mxu0 0
        %2117 = vmatprep.subr.bf16.mxu0 0
        %2118 = vmatpush1.bf16.msra.mxu0 0
        %2119 = vmatprep.subr.bf16.mxu0 0
        %2120 = vmatpush1.bf16.msra.mxu0 0
        %2121 = vmatprep.subr.bf16.mxu0 0
        %2122 = vmatpush1.bf16.msra.mxu0 0
        %2123 = vmatprep.mubr.bf16.mxu0 0
        %2124 = vmatmul.mubr.bf16.gmra.mrb[0].mxu0 %v2086
        %v2125 = vpop.f32.mrb[0].mxu0
        %v2126 = vadd.f32 0.0, %v2125
        %v2127 = vpop.f32.mrb[0].mxu0
        %v2128 = vadd.f32 0.0, %v2127
        %v2129 = vpop.f32.mrb[0].mxu0
        %v2130 = vadd.f32 0.0, %v2129
        %v2131 = vpop.f32.mrb[0].mxu0
        %v2132 = vadd.f32 0.0, %v2131
        %2133 = vmatprep.mubr.bf16.mxu0 0
        %2134 = vmatmul.mubr.bf16.gmra.mrb[0].mxu0 %v2089
        %v2135 = vpop.f32.mrb[0].mxu0
        %v2136 = vadd.f32 0.0, %v2135
        %v2137 = vpop.f32.mrb[0].mxu0
        %v2138 = vadd.f32 0.0, %v2137
        %v2139 = vpop.f32.mrb[0].mxu0
        %v2140 = vadd.f32 0.0, %v2139
        %v2141 = vpop.f32.mrb[0].mxu0
        %v2142 = vadd.f32 0.0, %v2141
        %2143 = vdwg.mxu0
        %v2148 = vunpack.c.l.b16 %v1803
        %v2149 = vunpack.c.l.b16 %v1804
        %v2150 = vunpack.c.l.b16 %v1805
        %v2151 = vunpack.c.l.b16 %v1806
        %v2152 = vpack.c.b16 %v2149, %v2148
        %v2153 = vpack.c.b16 %v2151, %v2150
        %v2155 = vsel %vm2084, %v2152, 0
        %v2158 = vsel %vm2084, %v2153, 0
        %2160 = vmatprep.subr.bf16.mxu0 %v1871
        %2161 = vmatpush1.bf16.msra.mxu0 %v1870
        %2162 = vmatprep.subr.bf16.mxu0 %v1873
        %2163 = vmatpush1.bf16.msra.mxu0 %v1872
        %2164 = vmatprep.subr.bf16.mxu0 %v1921
        %2165 = vmatpush1.bf16.msra.mxu0 %v1920
        %2166 = vmatprep.subr.bf16.mxu0 %v1923
        %2167 = vmatpush1.bf16.msra.mxu0 %v1922
        %2168 = vmatprep.subr.bf16.mxu0 %v1948
        %2169 = vmatpush1.bf16.msra.mxu0 %v1947
        %2170 = vmatprep.subr.bf16.mxu0 %v1950
        %2171 = vmatpush1.bf16.msra.mxu0 %v1949
        %2172 = vmatprep.subr.bf16.mxu0 0
        %2173 = vmatpush1.bf16.msra.mxu0 0
        %2174 = vmatprep.subr.bf16.mxu0 0
        %2175 = vmatpush1.bf16.msra.mxu0 0
        %2176 = vmatprep.subr.bf16.mxu0 0
        %2177 = vmatpush1.bf16.msra.mxu0 0
        %2178 = vmatprep.subr.bf16.mxu0 0
        %2179 = vmatpush1.bf16.msra.mxu0 0
        %2180 = vmatprep.subr.bf16.mxu0 0
        %2181 = vmatpush1.bf16.msra.mxu0 0
        %2182 = vmatprep.subr.bf16.mxu0 0
        %2183 = vmatpush1.bf16.msra.mxu0 0
        %2184 = vmatprep.subr.bf16.mxu0 0
        %2185 = vmatpush1.bf16.msra.mxu0 0
        %2186 = vmatprep.subr.bf16.mxu0 0
        %2187 = vmatpush1.bf16.msra.mxu0 0
        %2188 = vmatprep.subr.bf16.mxu0 0
        %2189 = vmatpush1.bf16.msra.mxu0 0
        %2190 = vmatprep.subr.bf16.mxu0 0
        %2191 = vmatpush1.bf16.msra.mxu0 0
        %2192 = vmatprep.mubr.bf16.mxu0 0
        %2193 = vmatmul.mubr.bf16.gmra.mrb[0].mxu0 %v2155
        %v2194 = vpop.f32.mrb[0].mxu0
        %v2195 = vadd.f32 %v2126, %v2194
        %v2196 = vpop.f32.mrb[0].mxu0
        %v2197 = vadd.f32 %v2128, %v2196
        %v2198 = vpop.f32.mrb[0].mxu0
        %v2199 = vadd.f32 %v2130, %v2198
        %v2200 = vpop.f32.mrb[0].mxu0
        %v2201 = vadd.f32 %v2132, %v2200
        %2202 = vmatprep.mubr.bf16.mxu0 0
        %2203 = vmatmul.mubr.bf16.gmra.mrb[0].mxu0 %v2158
        %v2204 = vpop.f32.mrb[0].mxu0
        %v2205 = vadd.f32 %v2136, %v2204
        %v2206 = vpop.f32.mrb[0].mxu0
        %v2207 = vadd.f32 %v2138, %v2206
        %v2208 = vpop.f32.mrb[0].mxu0
        %v2209 = vadd.f32 %v2140, %v2208
        %v2210 = vpop.f32.mrb[0].mxu0
        %v2211 = vadd.f32 %v2142, %v2210
        %2212 = vdwg.mxu0
        %2213 = vrot.lane.b32.xlu0 %v1863, 32
        %v2214 = vpop.permute.xlu0 %2213
        %2215 = vrot.lane.b32.xlu0 %v1867, 32
        %v2216 = vpop.permute.xlu0 %2215
        %vm2217 = vcmask 261120
        %v2218 = vsel %vm2217, %v2214, %v2216
        %vm2219 = vcmp.ne.s16.totalorder %v2214, 0
        %vm2220 = vcmp.ne.s16.totalorder %v2218, 0
        %vm2221 = vcmp.ne.s16.totalorder %v2216, 0
        %v2222 = vsel %vm2219, %v1843, 0
        %v2223 = vsel %vm2220, %v1836, 0
        %v2224 = vsel %vm2221, %v1849, 0
        %v2225 = vsel %vm2219, %v1846, 0
        %v2226 = vsel %vm2220, %v1837, 0
        %v2227 = vsel %vm2221, %v1852, 0
        %2228 = vrot.lane.b32.xlu0 %v1883, 34
        %v2229 = vpop.permute.xlu0 %2228
        %2230 = vrot.lane.b32.xlu0 %v1887, 34
        %v2231 = vpop.permute.xlu0 %2230
        %vm2232 = vcmask 277504
        %v2233 = vsel %vm2232, %v2229, %v2231
        %vm2234 = vcmp.ne.s16.totalorder %v2229, 0
        %vm2235 = vcmp.ne.s16.totalorder %v2233, 0
        %vm2236 = vcmp.ne.s16.totalorder %v2231, 0
        %v2237 = vsel %vm2234, %v1843, 0
        %v2238 = vsel %vm2235, %v1836, 0
        %v2239 = vsel %vm2236, %v1849, 0
        %v2240 = vsel %vm2234, %v1846, 0
        %v2241 = vsel %vm2235, %v1837, 0
        %v2242 = vsel %vm2236, %v1852, 0
        %2249 = vrot.lane.b32.xlu0 %v2237, 126
        %v2250 = vpop.permute.xlu0 %2249
        %2251 = vrot.lane.b32.xlu0 %v2238, 126
        %v2252 = vpop.permute.xlu0 %2251
        %2253 = vrot.lane.b32.xlu0 %v2239, 126
        %v2254 = vpop.permute.xlu0 %2253
        %2255 = vrot.lane.b32.xlu0 %v2240, 126
        %v2256 = vpop.permute.xlu0 %2255
        %2257 = vrot.lane.b32.xlu0 %v2241, 126
        %v2258 = vpop.permute.xlu0 %2257
        %2259 = vrot.lane.b32.xlu0 %v2242, 126
        %v2260 = vpop.permute.xlu0 %2259
        %v2261 = vsel %vm1946, %v2250, %v2252
        %v2262 = vsel %vm1946, %v2252, %v2254
        %v2263 = vsel %vm1946, %v2256, %v2258
        %v2264 = vsel %vm1946, %v2258, %v2260
        %v2269 = vunpack.c.l.b16 %v1811
        %v2270 = vunpack.c.l.b16 %v1812
        %v2271 = vunpack.c.l.b16 %v1813
        %v2272 = vunpack.c.l.b16 %v1814
        %v2273 = vpack.c.b16 %v2270, %v2269
        %v2274 = vpack.c.b16 %v2272, %v2271
        %2281 = vrot.lane.b32.xlu0 %v2222, 96
        %v2282 = vpop.permute.xlu0 %2281
        %2283 = vrot.lane.b32.xlu0 %v2223, 96
        %v2284 = vpop.permute.xlu0 %2283
        %2285 = vrot.lane.b32.xlu0 %v2224, 96
        %v2286 = vpop.permute.xlu0 %2285
        %2287 = vrot.lane.b32.xlu0 %v2225, 96
        %v2288 = vpop.permute.xlu0 %2287
        %2289 = vrot.lane.b32.xlu0 %v2226, 96
        %v2290 = vpop.permute.xlu0 %2289
        %2291 = vrot.lane.b32.xlu0 %v2227, 96
        %v2292 = vpop.permute.xlu0 %2291
        %2293 = vrot.lane.b32.xlu0 %v1920, 96
        %v2294 = vpop.permute.xlu0 %2293
        %2295 = vrot.lane.b32.xlu0 %v1921, 96
        %v2296 = vpop.permute.xlu0 %2295
        %2297 = vrot.lane.b32.xlu0 %v1912, 96
        %v2298 = vpop.permute.xlu0 %2297
        %2299 = vrot.lane.b32.xlu0 %v1922, 96
        %v2300 = vpop.permute.xlu0 %2299
        %2301 = vrot.lane.b32.xlu0 %v1923, 96
        %v2302 = vpop.permute.xlu0 %2301
        %2303 = vrot.lane.b32.xlu0 %v1918, 96
        %v2304 = vpop.permute.xlu0 %2303
        %2305 = vrot.lane.b32.xlu0 %v2261, 96
        %v2306 = vpop.permute.xlu0 %2305
        %2307 = vrot.lane.b32.xlu0 %v2262, 96
        %v2308 = vpop.permute.xlu0 %2307
        %2309 = vrot.lane.b32.xlu0 %v2254, 96
        %v2310 = vpop.permute.xlu0 %2309
        %2311 = vrot.lane.b32.xlu0 %v2263, 96
        %v2312 = vpop.permute.xlu0 %2311
        %2313 = vrot.lane.b32.xlu0 %v2264, 96
        %v2314 = vpop.permute.xlu0 %2313
        %2315 = vrot.lane.b32.xlu0 %v2260, 96
        %v2316 = vpop.permute.xlu0 %2315
        %vm2317 = vcmask 785408
        %v2318 = vsel %vm2317, %v2282, %v2284
        %v2319 = vsel %vm2317, %v2284, %v2286
        %v2320 = vsel %vm2317, %v2288, %v2290
        %v2321 = vsel %vm2317, %v2290, %v2292
        %v2322 = vsel %vm2317, %v2294, %v2296
        %v2323 = vsel %vm2317, %v2296, %v2298
        %v2324 = vsel %vm2317, %v2300, %v2302
        %v2325 = vsel %vm2317, %v2302, %v2304
        %v2326 = vsel %vm2317, %v2306, %v2308
        %v2327 = vsel %vm2317, %v2308, %v2310
        %v2328 = vsel %vm2317, %v2312, %v2314
        %v2329 = vsel %vm2317, %v2314, %v2316
        %v2343 = vsel %vm2084, %v2273, 0
        %v2346 = vsel %vm2084, %v2274, 0
        %2348 = vmatprep.subr.bf16.mxu0 %v2319
        %2349 = vmatpush1.bf16.msra.mxu0 %v2318
        %2350 = vmatprep.subr.bf16.mxu0 %v2321
        %2351 = vmatpush1.bf16.msra.mxu0 %v2320
        %2352 = vmatprep.subr.bf16.mxu0 %v2323
        %2353 = vmatpush1.bf16.msra.mxu0 %v2322
        %2354 = vmatprep.subr.bf16.mxu0 %v2325
        %2355 = vmatpush1.bf16.msra.mxu0 %v2324
        %2356 = vmatprep.subr.bf16.mxu0 %v2327
        %2357 = vmatpush1.bf16.msra.mxu0 %v2326
        %2358 = vmatprep.subr.bf16.mxu0 %v2329
        %2359 = vmatpush1.bf16.msra.mxu0 %v2328
        %2360 = vmatprep.subr.bf16.mxu0 0
        %2361 = vmatpush1.bf16.msra.mxu0 0
        %2362 = vmatprep.subr.bf16.mxu0 0
        %2363 = vmatpush1.bf16.msra.mxu0 0
        %2364 = vmatprep.subr.bf16.mxu0 0
        %2365 = vmatpush1.bf16.msra.mxu0 0
        %2366 = vmatprep.subr.bf16.mxu0 0
        %2367 = vmatpush1.bf16.msra.mxu0 0
        %2368 = vmatprep.subr.bf16.mxu0 0
        %2369 = vmatpush1.bf16.msra.mxu0 0
        %2370 = vmatprep.subr.bf16.mxu0 0
        %2371 = vmatpush1.bf16.msra.mxu0 0
        %2372 = vmatprep.subr.bf16.mxu0 0
        %2373 = vmatpush1.bf16.msra.mxu0 0
        %2374 = vmatprep.subr.bf16.mxu0 0
        %2375 = vmatpush1.bf16.msra.mxu0 0
        %2376 = vmatprep.subr.bf16.mxu0 0
        %2377 = vmatpush1.bf16.msra.mxu0 0
        %2378 = vmatprep.subr.bf16.mxu0 0
        %2379 = vmatpush1.bf16.msra.mxu0 0
        %2380 = vmatprep.mubr.bf16.mxu0 0
        %2381 = vmatmul.mubr.bf16.gmra.mrb[0].mxu0 %v2343
        %v2382 = vpop.f32.mrb[0].mxu0
        %v2383 = vadd.f32 0.0, %v2382
        %v2384 = vpop.f32.mrb[0].mxu0
        %v2385 = vadd.f32 0.0, %v2384
        %v2386 = vpop.f32.mrb[0].mxu0
        %v2387 = vadd.f32 0.0, %v2386
        %v2388 = vpop.f32.mrb[0].mxu0
        %v2389 = vadd.f32 0.0, %v2388
        %2390 = vmatprep.mubr.bf16.mxu0 0
        %2391 = vmatmul.mubr.bf16.gmra.mrb[0].mxu0 %v2346
        %v2392 = vpop.f32.mrb[0].mxu0
        %v2393 = vadd.f32 0.0, %v2392
        %v2394 = vpop.f32.mrb[0].mxu0
        %v2395 = vadd.f32 0.0, %v2394
        %v2396 = vpop.f32.mrb[0].mxu0
        %v2397 = vadd.f32 0.0, %v2396
        %v2398 = vpop.f32.mrb[0].mxu0
        %v2399 = vadd.f32 0.0, %v2398
        %2400 = vdwg.mxu0
        %v2401 = vadd.f32 %v2195, %v2383
        %v2402 = vadd.f32 %v2197, %v2385
        %v2403 = vadd.f32 %v2199, %v2387
        %v2404 = vadd.f32 %v2201, %v2389
        %v2405 = vadd.f32 %v2205, %v2393
        %v2406 = vadd.f32 %v2207, %v2395
        %v2407 = vadd.f32 %v2209, %v2397
        %v2408 = vadd.f32 %v2211, %v2399
        %2410 = vset.pattern.permute.xlu0 0
        %2411 = vperm.xlu0 %2410, %v1815
        %v2412 = vpop.permute.xlu0 %2411
        %2415 = vset.pattern.permute.xlu0 0
        %2416 = vperm.xlu0 %2415, %v1816
        %v2417 = vpop.permute.xlu0 %2416
        %2420 = vset.pattern.permute.xlu0 0
        %2421 = vperm.xlu0 %2420, %v1817
        %v2422 = vpop.permute.xlu0 %2421
        %2425 = vset.pattern.permute.xlu0 0
        %2426 = vperm.xlu0 %2425, %v1818
        %v2427 = vpop.permute.xlu0 %2426
        %v2429 = vadd.f32 %v2401, %v2412
        %v2430 = vadd.f32 %v2402, %v2412
        %v2431 = vadd.f32 %v2403, %v2417
        %v2432 = vadd.f32 %v2404, %v2417
        %v2433 = vadd.f32 %v2405, %v2422
        %v2434 = vadd.f32 %v2406, %v2422
        %v2435 = vadd.f32 %v2407, %v2427
        %v2436 = vadd.f32 %v2408, %v2427
        %v2437 = vld [vmem:[%s384] sm:$0xff]
        %v2438 = vld [vmem:[%s384 + $0x8] sm:$0xff]
        %v2439 = vld [vmem:[%s384 + $0x10] sm:$0xff]
        %v2440 = vld [vmem:[%s384 + $0x18] sm:$0xff]
        %v2441 = vld [vmem:[%s384 + $0x20] sm:$0xff]
        %v2442 = vld [vmem:[%s384 + $0x28] sm:$0xff]
        %v2443 = vld [vmem:[%s384 + $0x30] sm:$0xff]
        %v2444 = vld [vmem:[%s384 + $0x38] sm:$0xff]
        %v2445 = vadd.f32 %v2429, %v2437
        %v2446 = vadd.f32 %v2430, %v2438
        %v2447 = vadd.f32 %v2431, %v2439
        %v2448 = vadd.f32 %v2432, %v2440
        %v2449 = vadd.f32 %v2433, %v2441
        %v2450 = vadd.f32 %v2434, %v2442
        %v2451 = vadd.f32 %v2435, %v2443
        %v2452 = vadd.f32 %v2436, %v2444
        %2453 = vst [vmem:[%s379] sm:$0xff] %v2445
        %2454 = vst [vmem:[%s379 + $0x8] sm:$0xff] %v2446
        %2455 = vst [vmem:[%s379 + $0x10] sm:$0xff] %v2447
        %2456 = vst [vmem:[%s379 + $0x18] sm:$0xff] %v2448
        %2457 = vst [vmem:[%s379 + $0x20] sm:$0xff] %v2449
        %2458 = vst [vmem:[%s379 + $0x28] sm:$0xff] %v2450
        %2459 = vst [vmem:[%s379 + $0x30] sm:$0xff] %v2451
        %2460 = vst [vmem:[%s379 + $0x38] sm:$0xff] %v2452
        %s2461 = sand.u32 %s269, 1
        %s2462 = scalar_lea.sflag [#allocation4], %s2461
        %s2463 = sand.u32 %s269, 1
        %s2464 = smul.addr %s2463, 64
        %s2465 = scalar_lea.vmem [#allocation3], %s2464
        // Predicated region
        $region72: #{tpu_custom_call.1} parent=63 // pred_check
          %p2466 = pneg %p279
        $region73: #{tpu_custom_call.1} parent=63 // pred_check_branch
          %2468 = sbr.rel (%p2466) target = $region75
        $region74: #{tpu_custom_call.1} parent=63 // pred_region
          %s2470 = ssub.s32 1024, 1024
          %2471 = vsyncadd %s2462, %s2470
          %s2472 = smul.addr %s25, 8
          %s2473 = smul.addr %s2472, 128
          %s2474 = scalar_lea.hbm %s11, %s2473
          %s2475 = sshll.u32 %s2465, 4
          %s2476 = int_to_ptr.vmem [resolvable:$true] %s2475
          %2481 = dma.vmem_to_hbm [thread:$0]  %s2476, 1024, %s2474, %s2462, 256, 256, 16
        $region75: #{tpu_custom_call.1} parent=63 // pred_fallthru
          _
      $region64: #{tpu_custom_call.1} parent=5 // pred_fallthru
        _
      %p2482 = scmp.le.s32.totalorder 2, %s20
      // Predicated region
      $region76: #{tpu_custom_call.1} parent=5 // pred_check
        %p2483 = pneg %p2482
      $region77: #{tpu_custom_call.1} parent=5 // pred_check_branch
        %2485 = sbr.rel (%p2483) target = $region79
      $region78: #{tpu_custom_call.1} parent=5 // pred_region
        %s2486 = ssub.s32 %s20, 2
        // Predicated region
        $region80: #{tpu_custom_call.1} parent=78 // pred_check
          %p2487 = pneg %p285
        $region81: #{tpu_custom_call.1} parent=78 // pred_check_branch
          %2489 = sbr.rel (%p2487) target = $region83
        $region82: #{tpu_custom_call.1} parent=78 // pred_region
          %s2490 = sand.u32 %s270, 1
          %s2491 = scalar_lea.sflag [#allocation4], %s2490
          %s2492 = sand.u32 %s270, 1
          %s2493 = smul.addr %s2492, 64
          %s2494 = scalar_lea.vmem [#allocation3], %s2493
          %2495 = dma.done %s2491, 1024
        $region83: #{tpu_custom_call.1} parent=78 // pred_fallthru
          _
      $region79: #{tpu_custom_call.1} parent=5 // pred_fallthru
        _
    $region6: #{tpu_custom_call.1} parent=1 // loop_footer
      %s24 = sadd.s32 1, %s20
    $region7: #{tpu_custom_call.1} parent=1 // loop_footer_branch
      %19 = sbr.rel target = $region3
    $region8: #{tpu_custom_call.1} parent=1 // loop_exit
      _
    %2496 = vsyncpa [#allocation4], 1
    %s2497 = scalar_lea.sflag [#allocation4], 1
    %2498 = vsyncpa %s2497, 1

</llo_original>
